<compile_context>
chip_gen: v7x
topology: tpu7x:2x2x1
jax: 0.10.0
libtpu: 0.0.40
codegen_flags: <defaults>
</compile_context>

<pallas_src>
import functools

import jax
import jax.numpy as jnp
from jax import lax
from jax.experimental import pallas as pl
from jax.experimental.pallas import tpu as pltpu


def _block_kernel(x_ref, w_ref, cmask_ref, p_ref, ggc_ref, gcg_ref, o_ref, *,
                  W, groups, compute_dtype):
    """One grid step = one batch element.

    x_ref:     (1, Cin, H*W)   input image, pixels lane-dense (== NCHW view)
    w_ref:     (9, Cout, Cin)  standardized conv weight, taps ordered (dh, dw)
    cmask_ref: (3, H*W)        column border masks for dw = -1, 0, +1
    p_ref:     (1, Cout, 5)    packed params [bias, gamma, beta, scale, shift]
    ggc_ref:   (G, Cout)       one-hot group<-channel map
    gcg_ref:   (Cout, G)       one-hot channel<-group map
    o_ref:     (1, Cout, H*W)  output slab (== NCHW layout of the result)
    """
    Cin = x_ref.shape[1]
    HW = x_ref.shape[2]
    Cout = o_ref.shape[1]
    cg = Cout // groups

    x2 = x_ref[0].astype(jnp.float32)                       # (Cin, HW)
    w_taps = w_ref[...]                                     # (9, Cout, Cin)
    cmask = cmask_ref[...]                                  # (3, HW)

    # ---- 3x3 conv (padding=1) as 9 accumulating tap matmuls ---------------
    # A lane-padded copy of the image turns every (dh, dw) tap into a static
    # lane slice; columns that wrap into the neighbouring row are zeroed by
    # the precomputed cmask.  Pad width is lane-aligned (multiple of 128).
    pad_w = -(-(W + 1) // 128) * 128
    zpad = jnp.zeros((Cin, pad_w), jnp.float32)
    xz = jnp.concatenate([zpad, x2, zpad], axis=1)          # (Cin, HW + 2*pad_w)

    y = None                                                # conv output, no bias
    t = 0
    for dh in (-1, 0, 1):
        for dw in (-1, 0, 1):
            start = pad_w + dh * W + dw
            tap = xz[:, start:start + HW]                   # x[c, i+dh, j+dw]
            if dw != 0:
                tap = tap * cmask[dw + 1:dw + 2, :]         # zero wrapped columns
            contrib = jnp.dot(w_taps[t].astype(compute_dtype),
                              tap.astype(compute_dtype),
                              preferred_element_type=jnp.float32)
            y = contrib if y is None else y + contrib       # (Cout, HW)
            t += 1

    # ---- unpack the single packed-parameter block --------------------------
    params = p_ref[0].astype(jnp.float32)                   # (Cout, 5)
    bias = params[:, 0:1]
    gamma = params[:, 1:2]
    beta = params[:, 2:3]
    scale = params[:, 3:4]
    shift = params[:, 4:5]

    # ---- GroupNorm statistics (conv bias folded in analytically) -----------
    npix = float(HW)
    s1_raw = jnp.sum(y, axis=1, keepdims=True)              # (Cout, 1)
    s2_raw = jnp.sum(y * y, axis=1, keepdims=True)          # (Cout, 1)
    s1 = s1_raw + npix * bias                                # sums of (y + bias)
    s2 = s2_raw + 2.0 * bias * s1_raw + npix * bias * bias
    # TODO(synk): E[x^2]-E[x]^2 can cancel catastrophically if |mean| >> std;
    # switch to centered two-pass stats if activation scales grow.

    count = float(cg) * npix
    gsum = jnp.dot(ggc_ref[...], jnp.concatenate([s1, s2], axis=1),
                   preferred_element_type=jnp.float32)       # (G, 2)
    g_mean = gsum[:, 0:1] / count
    g_var = gsum[:, 1:2] / count - g_mean * g_mean           # population variance
    g_inv = lax.rsqrt(g_var + 1e-5)                          # GroupNorm eps = 1e-5
    ch = jnp.dot(gcg_ref[...], jnp.concatenate([g_mean, g_inv], axis=1),
                 preferred_element_type=jnp.float32)         # (Cout, 2)
    ch_mean = ch[:, 0:1]
    ch_inv = ch[:, 1:2]

    # ---- fold conv bias + GroupNorm affine + (scale, shift) into one FMA ---
    gn_a = ch_inv * gamma                                    # (Cout, 1)
    gn_b = beta + (bias - ch_mean) * gn_a
    sc = scale + 1.0                                         # scale=shift=0 when unused
    a_c = gn_a * sc
    b_c = gn_b * sc + shift

    z = y * a_c + b_c                                        # broadcast over lanes
    o_ref[0] = (z * jax.nn.sigmoid(z)).astype(o_ref.dtype)   # SiLU, lane-dense store


def block_forward(x_nchw, weight_oihw, bias, gamma, beta, *, groups,
                  scale_shift=None, compute_dtype=jnp.float32):
    """Pallas equivalent of Block.forward.  x_nchw: (N, Cin, H, W)."""
    N, Cin, H, W = x_nchw.shape
    Cout = weight_oihw.shape[0]
    assert Cout % groups == 0
    HW = H * W
    f32 = jnp.float32

    # ---- hoisted weight standardization (grid-invariant, done once) --------
    # NOTE: the torch module computes eps but never applies it inside sqrt;
    # we match the module exactly as written (no eps).
    w = weight_oihw.astype(f32)
    wm = jnp.mean(w, axis=(1, 2, 3), keepdims=True)
    wv = jnp.mean((w - wm) ** 2, axis=(1, 2, 3), keepdims=True)
    wn = (w - wm) / jnp.sqrt(wv)
    # OIHW -> (9 taps, Cout, Cin), taps ordered (dh, dw) row-major
    w_taps = jnp.transpose(wn, (2, 3, 0, 1)).reshape(9, Cout, Cin)
    w_taps = w_taps.astype(compute_dtype)

    # ---- hoisted grid-invariant small tensors -------------------------------
    j = jnp.arange(HW, dtype=jnp.int32) % W
    cmask = jnp.stack([(j >= 1).astype(f32),                 # dw = -1
                       jnp.ones((HW,), f32),                 # dw =  0
                       (j <= W - 2).astype(f32)], axis=0)    # dw = +1

    ch_group = jnp.arange(Cout, dtype=jnp.int32) // (Cout // groups)
    ggc = (ch_group[None, :] == jnp.arange(groups)[:, None]).astype(f32)  # (G, Cout)
    gcg = ggc.T                                                           # (Cout, G)

    base = jnp.stack([bias.astype(f32), gamma.astype(f32), beta.astype(f32)],
                     axis=-1)                                # (Cout, 3)
    base = jnp.broadcast_to(base[None], (N, Cout, 3))
    if scale_shift is None:
        ss = jnp.zeros((N, Cout, 2), f32)                    # identity: *(0+1)+0
    else:
        scale, shift = scale_shift
        ss = jnp.stack([scale.reshape(N, Cout).astype(f32),
                        shift.reshape(N, Cout).astype(f32)], axis=-1)
    params = jnp.concatenate([base, ss], axis=-1)            # (N, Cout, 5)

    # ---- free NCHW views (no transpose / pad HBM passes) -------------------
    x2d = x_nchw.reshape(N, Cin, HW)

    kernel = functools.partial(_block_kernel, W=W, groups=groups,
                               compute_dtype=compute_dtype)

    # crude VMEM budget: double-buffered blocks + in-kernel temporaries
    def _pad(a, m):
        return ((a + m - 1) // m) * m
    w_item = jnp.dtype(compute_dtype).itemsize
    xbytes = _pad(Cin, 8) * _pad(HW, 128) * 4
    obytes = _pad(Cout, 8) * _pad(HW, 128) * 4
    wbytes = 9 * _pad(Cout, 8) * _pad(Cin, 128) * w_item
    est = 2 * (xbytes + obytes + wbytes) + 8 * xbytes + 4 * obytes + (1 << 20)
    vmem_limit = int(min(48 * 2 ** 20, max(16 * 2 ** 20, 2 * est)))

    out = pl.pallas_call(
        kernel,
        out_shape=jax.ShapeDtypeStruct((N, Cout, HW), x_nchw.dtype),
        grid_spec=pltpu.PrefetchScalarGridSpec(
            num_scalar_prefetch=0,
            grid=(N,),
            in_specs=[
                pl.BlockSpec((1, Cin, HW), lambda n: (n, 0, 0)),    # x (per step)
                pl.BlockSpec((9, Cout, Cin), lambda n: (0, 0, 0)),  # weight (const)
                pl.BlockSpec((3, HW), lambda n: (0, 0)),            # border masks (const)
                pl.BlockSpec((1, Cout, 5), lambda n: (n, 0, 0)),    # packed params (per step)
                pl.BlockSpec((groups, Cout), lambda n: (0, 0)),     # group<-channel (const)
                pl.BlockSpec((Cout, groups), lambda n: (0, 0)),     # channel<-group (const)
            ],
            out_specs=pl.BlockSpec((1, Cout, HW), lambda n: (n, 0, 0)),
        ),
        compiler_params=pltpu.CompilerParams(
            dimension_semantics=("parallel",),     # v7x: two TCs split the batch
            vmem_limit_bytes=vmem_limit),
    )(x2d, w_taps, cmask, params, ggc, gcg)

    return out.reshape(N, Cout, H, W)


# ---------------- pure-JAX reference (for validation only) ----------------
def block_reference(x_nchw, weight_oihw, bias, gamma, beta, *, groups,
                    scale_shift=None):
    w = weight_oihw
    wm = w.mean(axis=(1, 2, 3), keepdims=True)
    wv = ((w - wm) ** 2).mean(axis=(1, 2, 3), keepdims=True)
    wn = (w - wm) / jnp.sqrt(wv)
    y = jax.lax.conv_general_dilated(
        x_nchw, wn, window_strides=(1, 1), padding=((1, 1), (1, 1)),
        dimension_numbers=("NCHW", "OIHW", "NCHW"),
        precision=jax.lax.Precision.HIGHEST)
    y = y + bias[None, :, None, None]
    N, C, H, W = y.shape
    yg = y.reshape(N, groups, C // groups, H, W)
    m = yg.mean(axis=(2, 3, 4), keepdims=True)
    v = ((yg - m) ** 2).mean(axis=(2, 3, 4), keepdims=True)
    yn = ((yg - m) / jnp.sqrt(v + 1e-5)).reshape(N, C, H, W)
    yn = yn * gamma[None, :, None, None] + beta[None, :, None, None]
    if scale_shift is not None:
        scale, shift = scale_shift
        yn = yn * (scale.reshape(N, C, 1, 1) + 1.0) + shift.reshape(N, C, 1, 1)
    return yn * jax.nn.sigmoid(yn)


if __name__ == "__main__":
    # Small shapes consistent with the module: N=2, Cin=4, Cout=16, 16x16, groups=8
    N, Cin, Cout, H, W, G = 2, 4, 16, 16, 16, 8
    key = jax.random.PRNGKey(0)
    kx, kw, kb, kg, kbe, ks, ksh = jax.random.split(key, 7)

    x = jax.random.normal(kx, (N, Cin, H, W), jnp.float32)
    weight = 0.1 * jax.random.normal(kw, (Cout, Cin, 3, 3), jnp.float32)
    bias = 0.05 * jax.random.normal(kb, (Cout,), jnp.float32)
    gamma = 1.0 + 0.1 * jax.random.normal(kg, (Cout,), jnp.float32)
    beta = 0.1 * jax.random.normal(kbe, (Cout,), jnp.float32)

    # Case 1: scale_shift=None, f32 matmul operands
    out = jax.block_until_ready(
        block_forward(x, weight, bias, gamma, beta, groups=G))
    ref = block_reference(x, weight, bias, gamma, beta, groups=G)
    assert out.shape == (N, Cout, H, W)
    assert jnp.allclose(out, ref, rtol=1e-3, atol=1e-3), "mismatch (no scale_shift)"

    # Case 2: with scale_shift
    scale = 0.1 * jax.random.normal(ks, (N, Cout), jnp.float32)
    shift = 0.1 * jax.random.normal(ksh, (N, Cout), jnp.float32)
    out2 = jax.block_until_ready(
        block_forward(x, weight, bias, gamma, beta, groups=G,
                      scale_shift=(scale, shift)))
    ref2 = block_reference(x, weight, bias, gamma, beta, groups=G,
                           scale_shift=(scale, shift))
    assert jnp.allclose(out2, ref2, rtol=1e-3, atol=1e-3), "mismatch (scale_shift)"

    # Case 3: bf16 matmul operands (MXU-native path), looser tolerance
    out3 = jax.block_until_ready(
        block_forward(x, weight, bias, gamma, beta, groups=G,
                      scale_shift=(scale, shift), compute_dtype=jnp.bfloat16))
    assert jnp.allclose(out3, ref2, rtol=2e-2, atol=2e-2), "mismatch (bf16 compute)"

    print("KERNEL_OK")
</pallas_src>

<mosaic_0001>
module attributes {stable_mosaic.version = 11 : i64} {
  func.func @_block_kernel(%arg0: i32, %arg1: memref<1x4x256xf32, #tpu.memory_space<vmem>>, %arg2: memref<9x16x4xf32, #tpu.memory_space<vmem>>, %arg3: memref<3x256xf32, #tpu.memory_space<vmem>>, %arg4: memref<1x16x5xf32, #tpu.memory_space<vmem>>, %arg5: memref<8x16xf32, #tpu.memory_space<vmem>>, %arg6: memref<16x8xf32, #tpu.memory_space<vmem>>, %arg7: memref<1x16x256xf32, #tpu.memory_space<vmem>>) attributes {dimension_semantics = [#tpu.dimension_semantics<parallel>], iteration_bounds = array<i64: 2>, scalar_prefetch = 0 : i64, scratch_operands = 0 : i64, tpu.core_type = #tpu.core_type<tc>, window_params = [{transform_indices = @transform_0, window_bounds = array<i64: 1, 4, 256>}, {pipeline_mode = #tpu.pipeline_mode<synchronous>, transform_indices = @transform_1, window_bounds = array<i64: 9, 16, 4>}, {pipeline_mode = #tpu.pipeline_mode<synchronous>, transform_indices = @transform_2, window_bounds = array<i64: 3, 256>}, {transform_indices = @transform_3, window_bounds = array<i64: 1, 16, 5>}, {pipeline_mode = #tpu.pipeline_mode<synchronous>, transform_indices = @transform_4, window_bounds = array<i64: 8, 16>}, {pipeline_mode = #tpu.pipeline_mode<synchronous>, transform_indices = @transform_5, window_bounds = array<i64: 16, 8>}, {transform_indices = @transform_6, window_bounds = array<i64: 1, 16, 256>}]} {
    %c0 = arith.constant 0 : index
    %c0_0 = arith.constant 0 : index
    %c0_1 = arith.constant 0 : index
    %0 = vector.load %arg1[%c0, %c0_0, %c0_1] : memref<1x4x256xf32, #tpu.memory_space<vmem>>, vector<1x4x256xf32>
    %1 = vector.shape_cast %0 : vector<1x4x256xf32> to vector<4x256xf32>
    %c0_2 = arith.constant 0 : index
    %c0_3 = arith.constant 0 : index
    %c0_4 = arith.constant 0 : index
    %2 = vector.load %arg2[%c0_2, %c0_3, %c0_4] : memref<9x16x4xf32, #tpu.memory_space<vmem>>, vector<9x16x4xf32>
    %c0_5 = arith.constant 0 : index
    %c0_6 = arith.constant 0 : index
    %3 = vector.load %arg3[%c0_5, %c0_6] : memref<3x256xf32, #tpu.memory_space<vmem>>, vector<3x256xf32>
    %cst = arith.constant 0.000000e+00 : f32
    %4 = vector.broadcast %cst : f32 to vector<4x128xf32>
    %5 = tpu.concatenate %4, %1, %4 in 1 : vector<4x128xf32>, vector<4x256xf32>, vector<4x128xf32> -> vector<4x512xf32>
    %6 = vector.extract_strided_slice %5 {offsets = [0, 111], sizes = [4, 256], strides = [1, 1]} : vector<4x512xf32> to vector<4x256xf32>
    %7 = vector.extract_strided_slice %3 {offsets = [0, 0], sizes = [1, 256], strides = [1, 1]} : vector<3x256xf32> to vector<1x256xf32>
    %8 = vector.broadcast %7 : vector<1x256xf32> to vector<4x256xf32>
    %9 = arith.mulf %6, %8 : vector<4x256xf32>
    %10 = vector.extract_strided_slice %2 {offsets = [0, 0, 0], sizes = [1, 16, 4], strides = [1, 1, 1]} : vector<9x16x4xf32> to vector<1x16x4xf32>
    %11 = vector.shape_cast %10 : vector<1x16x4xf32> to vector<16x4xf32>
    %cst_7 = arith.constant dense<0.000000e+00> : vector<16x256xf32>
    %12 = tpu.matmul %11, %9, %cst_7 {dimension_numbers = #tpu.dot_dimension_numbers<[1], [0], [0], [1], [0, 0, 1, 1], [], []>} : vector<16x4xf32>, vector<4x256xf32>, vector<16x256xf32> -> vector<16x256xf32>
    %13 = vector.extract_strided_slice %5 {offsets = [0, 112], sizes = [4, 256], strides = [1, 1]} : vector<4x512xf32> to vector<4x256xf32>
    %14 = vector.extract_strided_slice %2 {offsets = [1, 0, 0], sizes = [1, 16, 4], strides = [1, 1, 1]} : vector<9x16x4xf32> to vector<1x16x4xf32>
    %15 = vector.shape_cast %14 : vector<1x16x4xf32> to vector<16x4xf32>
    %cst_8 = arith.constant dense<0.000000e+00> : vector<16x256xf32>
    %16 = tpu.matmul %15, %13, %cst_8 {dimension_numbers = #tpu.dot_dimension_numbers<[1], [0], [0], [1], [0, 0, 1, 1], [], []>} : vector<16x4xf32>, vector<4x256xf32>, vector<16x256xf32> -> vector<16x256xf32>
    %17 = arith.addf %12, %16 : vector<16x256xf32>
    %18 = vector.extract_strided_slice %5 {offsets = [0, 113], sizes = [4, 256], strides = [1, 1]} : vector<4x512xf32> to vector<4x256xf32>
    %19 = vector.extract_strided_slice %3 {offsets = [2, 0], sizes = [1, 256], strides = [1, 1]} : vector<3x256xf32> to vector<1x256xf32>
    %20 = vector.broadcast %19 : vector<1x256xf32> to vector<4x256xf32>
    %21 = arith.mulf %18, %20 : vector<4x256xf32>
    %22 = vector.extract_strided_slice %2 {offsets = [2, 0, 0], sizes = [1, 16, 4], strides = [1, 1, 1]} : vector<9x16x4xf32> to vector<1x16x4xf32>
    %23 = vector.shape_cast %22 : vector<1x16x4xf32> to vector<16x4xf32>
    %cst_9 = arith.constant dense<0.000000e+00> : vector<16x256xf32>
    %24 = tpu.matmul %23, %21, %cst_9 {dimension_numbers = #tpu.dot_dimension_numbers<[1], [0], [0], [1], [0, 0, 1, 1], [], []>} : vector<16x4xf32>, vector<4x256xf32>, vector<16x256xf32> -> vector<16x256xf32>
    %25 = arith.addf %17, %24 : vector<16x256xf32>
    %26 = vector.extract_strided_slice %5 {offsets = [0, 127], sizes = [4, 256], strides = [1, 1]} : vector<4x512xf32> to vector<4x256xf32>
    %27 = vector.extract_strided_slice %3 {offsets = [0, 0], sizes = [1, 256], strides = [1, 1]} : vector<3x256xf32> to vector<1x256xf32>
    %28 = vector.broadcast %27 : vector<1x256xf32> to vector<4x256xf32>
    %29 = arith.mulf %26, %28 : vector<4x256xf32>
    %30 = vector.extract_strided_slice %2 {offsets = [3, 0, 0], sizes = [1, 16, 4], strides = [1, 1, 1]} : vector<9x16x4xf32> to vector<1x16x4xf32>
    %31 = vector.shape_cast %30 : vector<1x16x4xf32> to vector<16x4xf32>
    %cst_10 = arith.constant dense<0.000000e+00> : vector<16x256xf32>
    %32 = tpu.matmul %31, %29, %cst_10 {dimension_numbers = #tpu.dot_dimension_numbers<[1], [0], [0], [1], [0, 0, 1, 1], [], []>} : vector<16x4xf32>, vector<4x256xf32>, vector<16x256xf32> -> vector<16x256xf32>
    %33 = arith.addf %25, %32 : vector<16x256xf32>
    %34 = vector.extract_strided_slice %5 {offsets = [0, 128], sizes = [4, 256], strides = [1, 1]} : vector<4x512xf32> to vector<4x256xf32>
    %35 = vector.extract_strided_slice %2 {offsets = [4, 0, 0], sizes = [1, 16, 4], strides = [1, 1, 1]} : vector<9x16x4xf32> to vector<1x16x4xf32>
    %36 = vector.shape_cast %35 : vector<1x16x4xf32> to vector<16x4xf32>
    %cst_11 = arith.constant dense<0.000000e+00> : vector<16x256xf32>
    %37 = tpu.matmul %36, %34, %cst_11 {dimension_numbers = #tpu.dot_dimension_numbers<[1], [0], [0], [1], [0, 0, 1, 1], [], []>} : vector<16x4xf32>, vector<4x256xf32>, vector<16x256xf32> -> vector<16x256xf32>
    %38 = arith.addf %33, %37 : vector<16x256xf32>
    %39 = vector.extract_strided_slice %5 {offsets = [0, 129], sizes = [4, 256], strides = [1, 1]} : vector<4x512xf32> to vector<4x256xf32>
    %40 = vector.extract_strided_slice %3 {offsets = [2, 0], sizes = [1, 256], strides = [1, 1]} : vector<3x256xf32> to vector<1x256xf32>
    %41 = vector.broadcast %40 : vector<1x256xf32> to vector<4x256xf32>
    %42 = arith.mulf %39, %41 : vector<4x256xf32>
    %43 = vector.extract_strided_slice %2 {offsets = [5, 0, 0], sizes = [1, 16, 4], strides = [1, 1, 1]} : vector<9x16x4xf32> to vector<1x16x4xf32>
    %44 = vector.shape_cast %43 : vector<1x16x4xf32> to vector<16x4xf32>
    %cst_12 = arith.constant dense<0.000000e+00> : vector<16x256xf32>
    %45 = tpu.matmul %44, %42, %cst_12 {dimension_numbers = #tpu.dot_dimension_numbers<[1], [0], [0], [1], [0, 0, 1, 1], [], []>} : vector<16x4xf32>, vector<4x256xf32>, vector<16x256xf32> -> vector<16x256xf32>
    %46 = arith.addf %38, %45 : vector<16x256xf32>
    %47 = vector.extract_strided_slice %5 {offsets = [0, 143], sizes = [4, 256], strides = [1, 1]} : vector<4x512xf32> to vector<4x256xf32>
    %48 = vector.extract_strided_slice %3 {offsets = [0, 0], sizes = [1, 256], strides = [1, 1]} : vector<3x256xf32> to vector<1x256xf32>
    %49 = vector.broadcast %48 : vector<1x256xf32> to vector<4x256xf32>
    %50 = arith.mulf %47, %49 : vector<4x256xf32>
    %51 = vector.extract_strided_slice %2 {offsets = [6, 0, 0], sizes = [1, 16, 4], strides = [1, 1, 1]} : vector<9x16x4xf32> to vector<1x16x4xf32>
    %52 = vector.shape_cast %51 : vector<1x16x4xf32> to vector<16x4xf32>
    %cst_13 = arith.constant dense<0.000000e+00> : vector<16x256xf32>
    %53 = tpu.matmul %52, %50, %cst_13 {dimension_numbers = #tpu.dot_dimension_numbers<[1], [0], [0], [1], [0, 0, 1, 1], [], []>} : vector<16x4xf32>, vector<4x256xf32>, vector<16x256xf32> -> vector<16x256xf32>
    %54 = arith.addf %46, %53 : vector<16x256xf32>
    %55 = vector.extract_strided_slice %5 {offsets = [0, 144], sizes = [4, 256], strides = [1, 1]} : vector<4x512xf32> to vector<4x256xf32>
    %56 = vector.extract_strided_slice %2 {offsets = [7, 0, 0], sizes = [1, 16, 4], strides = [1, 1, 1]} : vector<9x16x4xf32> to vector<1x16x4xf32>
    %57 = vector.shape_cast %56 : vector<1x16x4xf32> to vector<16x4xf32>
    %cst_14 = arith.constant dense<0.000000e+00> : vector<16x256xf32>
    %58 = tpu.matmul %57, %55, %cst_14 {dimension_numbers = #tpu.dot_dimension_numbers<[1], [0], [0], [1], [0, 0, 1, 1], [], []>} : vector<16x4xf32>, vector<4x256xf32>, vector<16x256xf32> -> vector<16x256xf32>
    %59 = arith.addf %54, %58 : vector<16x256xf32>
    %60 = vector.extract_strided_slice %5 {offsets = [0, 145], sizes = [4, 256], strides = [1, 1]} : vector<4x512xf32> to vector<4x256xf32>
    %61 = vector.extract_strided_slice %3 {offsets = [2, 0], sizes = [1, 256], strides = [1, 1]} : vector<3x256xf32> to vector<1x256xf32>
    %62 = vector.broadcast %61 : vector<1x256xf32> to vector<4x256xf32>
    %63 = arith.mulf %60, %62 : vector<4x256xf32>
    %64 = vector.extract_strided_slice %2 {offsets = [8, 0, 0], sizes = [1, 16, 4], strides = [1, 1, 1]} : vector<9x16x4xf32> to vector<1x16x4xf32>
    %65 = vector.shape_cast %64 : vector<1x16x4xf32> to vector<16x4xf32>
    %cst_15 = arith.constant dense<0.000000e+00> : vector<16x256xf32>
    %66 = tpu.matmul %65, %63, %cst_15 {dimension_numbers = #tpu.dot_dimension_numbers<[1], [0], [0], [1], [0, 0, 1, 1], [], []>} : vector<16x4xf32>, vector<4x256xf32>, vector<16x256xf32> -> vector<16x256xf32>
    %67 = arith.addf %59, %66 : vector<16x256xf32>
    %c0_16 = arith.constant 0 : index
    %c0_17 = arith.constant 0 : index
    %c0_18 = arith.constant 0 : index
    %68 = vector.load %arg4[%c0_16, %c0_17, %c0_18] : memref<1x16x5xf32, #tpu.memory_space<vmem>>, vector<1x16x5xf32>
    %69 = vector.shape_cast %68 : vector<1x16x5xf32> to vector<16x5xf32>
    %70 = vector.extract_strided_slice %69 {offsets = [0, 0], sizes = [16, 1], strides = [1, 1]} : vector<16x5xf32> to vector<16x1xf32>
    %71 = vector.extract_strided_slice %69 {offsets = [0, 1], sizes = [16, 1], strides = [1, 1]} : vector<16x5xf32> to vector<16x1xf32>
    %72 = vector.extract_strided_slice %69 {offsets = [0, 2], sizes = [16, 1], strides = [1, 1]} : vector<16x5xf32> to vector<16x1xf32>
    %73 = vector.extract_strided_slice %69 {offsets = [0, 3], sizes = [16, 1], strides = [1, 1]} : vector<16x5xf32> to vector<16x1xf32>
    %74 = vector.extract_strided_slice %69 {offsets = [0, 4], sizes = [16, 1], strides = [1, 1]} : vector<16x5xf32> to vector<16x1xf32>
    %cst_19 = arith.constant dense<0.000000e+00> : vector<16xf32>
    %75 = vector.multi_reduction <add>, %67, %cst_19 [1] : vector<16x256xf32> to vector<16xf32>
    %76 = vector.shape_cast %75 : vector<16xf32> to vector<16x1xf32>
    %77 = arith.mulf %67, %67 : vector<16x256xf32>
    %cst_20 = arith.constant dense<0.000000e+00> : vector<16xf32>
    %78 = vector.multi_reduction <add>, %77, %cst_20 [1] : vector<16x256xf32> to vector<16xf32>
    %79 = vector.shape_cast %78 : vector<16xf32> to vector<16x1xf32>
    %cst_21 = arith.constant 2.560000e+02 : f32
    %80 = vector.broadcast %cst_21 : f32 to vector<16x1xf32>
    %81 = arith.mulf %80, %70 : vector<16x1xf32>
    %82 = arith.addf %76, %81 : vector<16x1xf32>
    %cst_22 = arith.constant 2.000000e+00 : f32
    %83 = vector.broadcast %cst_22 : f32 to vector<16x1xf32>
    %84 = arith.mulf %83, %70 : vector<16x1xf32>
    %85 = arith.mulf %84, %76 : vector<16x1xf32>
    %86 = arith.addf %79, %85 : vector<16x1xf32>
    %cst_23 = arith.constant 2.560000e+02 : f32
    %87 = vector.broadcast %cst_23 : f32 to vector<16x1xf32>
    %88 = arith.mulf %87, %70 : vector<16x1xf32>
    %89 = arith.mulf %88, %70 : vector<16x1xf32>
    %90 = arith.addf %86, %89 : vector<16x1xf32>
    %c0_24 = arith.constant 0 : index
    %c0_25 = arith.constant 0 : index
    %91 = vector.load %arg5[%c0_24, %c0_25] : memref<8x16xf32, #tpu.memory_space<vmem>>, vector<8x16xf32>
    %92 = tpu.concatenate %82, %90 in 1 : vector<16x1xf32>, vector<16x1xf32> -> vector<16x2xf32>
    %cst_26 = arith.constant dense<0.000000e+00> : vector<8x2xf32>
    %93 = tpu.matmul %91, %92, %cst_26 {dimension_numbers = #tpu.dot_dimension_numbers<[1], [0], [0], [1], [0, 0, 1, 1], [], []>} : vector<8x16xf32>, vector<16x2xf32>, vector<8x2xf32> -> vector<8x2xf32>
    %94 = vector.extract_strided_slice %93 {offsets = [0, 0], sizes = [8, 1], strides = [1, 1]} : vector<8x2xf32> to vector<8x1xf32>
    %cst_27 = arith.constant 5.120000e+02 : f32
    %95 = vector.broadcast %cst_27 : f32 to vector<8x1xf32>
    %96 = arith.divf %94, %95 : vector<8x1xf32>
    %97 = vector.extract_strided_slice %93 {offsets = [0, 1], sizes = [8, 1], strides = [1, 1]} : vector<8x2xf32> to vector<8x1xf32>
    %cst_28 = arith.constant 5.120000e+02 : f32
    %98 = vector.broadcast %cst_28 : f32 to vector<8x1xf32>
    %99 = arith.divf %97, %98 : vector<8x1xf32>
    %100 = arith.mulf %96, %96 : vector<8x1xf32>
    %101 = arith.subf %99, %100 : vector<8x1xf32>
    %cst_29 = arith.constant 9.99999974E-6 : f32
    %102 = vector.broadcast %cst_29 : f32 to vector<8x1xf32>
    %103 = arith.addf %101, %102 : vector<8x1xf32>
    %104 = math.rsqrt %103 : vector<8x1xf32>
    %c0_30 = arith.constant 0 : index
    %c0_31 = arith.constant 0 : index
    %105 = vector.load %arg6[%c0_30, %c0_31] : memref<16x8xf32, #tpu.memory_space<vmem>>, vector<16x8xf32>
    %106 = tpu.concatenate %96, %104 in 1 : vector<8x1xf32>, vector<8x1xf32> -> vector<8x2xf32>
    %cst_32 = arith.constant dense<0.000000e+00> : vector<16x2xf32>
    %107 = tpu.matmul %105, %106, %cst_32 {dimension_numbers = #tpu.dot_dimension_numbers<[1], [0], [0], [1], [0, 0, 1, 1], [], []>} : vector<16x8xf32>, vector<8x2xf32>, vector<16x2xf32> -> vector<16x2xf32>
    %108 = vector.extract_strided_slice %107 {offsets = [0, 0], sizes = [16, 1], strides = [1, 1]} : vector<16x2xf32> to vector<16x1xf32>
    %109 = vector.extract_strided_slice %107 {offsets = [0, 1], sizes = [16, 1], strides = [1, 1]} : vector<16x2xf32> to vector<16x1xf32>
    %110 = arith.mulf %109, %71 : vector<16x1xf32>
    %111 = arith.subf %70, %108 : vector<16x1xf32>
    %112 = arith.mulf %111, %110 : vector<16x1xf32>
    %113 = arith.addf %72, %112 : vector<16x1xf32>
    %cst_33 = arith.constant 1.000000e+00 : f32
    %114 = vector.broadcast %cst_33 : f32 to vector<16x1xf32>
    %115 = arith.addf %73, %114 : vector<16x1xf32>
    %116 = arith.mulf %110, %115 : vector<16x1xf32>
    %117 = arith.mulf %113, %115 : vector<16x1xf32>
    %118 = arith.addf %117, %74 : vector<16x1xf32>
    %119 = vector.broadcast %116 : vector<16x1xf32> to vector<16x256xf32>
    %120 = arith.mulf %67, %119 : vector<16x256xf32>
    %121 = vector.broadcast %118 : vector<16x1xf32> to vector<16x256xf32>
    %122 = arith.addf %120, %121 : vector<16x256xf32>
    %123 = arith.negf %122 : vector<16x256xf32>
    %124 = math.exp %123 : vector<16x256xf32>
    %cst_34 = arith.constant 1.000000e+00 : f32
    %125 = vector.broadcast %cst_34 : f32 to vector<16x256xf32>
    %126 = arith.addf %125, %124 : vector<16x256xf32>
    %127 = arith.divf %125, %126 : vector<16x256xf32>
    %128 = arith.mulf %122, %127 : vector<16x256xf32>
    %c0_35 = arith.constant 0 : index
    %c0_36 = arith.constant 0 : index
    %c0_37 = arith.constant 0 : index
    %129 = vector.load %arg7[%c0_35, %c0_36, %c0_37] : memref<1x16x256xf32, #tpu.memory_space<vmem>>, vector<1x16x256xf32>
    %130 = vector.shape_cast %129 : vector<1x16x256xf32> to vector<16x256xf32>
    %131 = vector.shape_cast %128 : vector<16x256xf32> to vector<1x16x256xf32>
    tpu.vector_store %arg7[%c0_35, %c0_36, %c0_37], %131 {strides = array<i32>} : memref<1x16x256xf32, #tpu.memory_space<vmem>>, vector<1x16x256xf32>,
    return
  }
  func.func @transform_0(%arg0: i32) -> (i32, i32, i32) {
    %c0_i32 = arith.constant 0 : i32
    %c0_i32_0 = arith.constant 0 : i32
    %c0_i32_1 = arith.constant 0 : i32
    return %arg0, %c0_i32, %c0_i32_0 : i32, i32, i32
  }
  func.func @transform_1(%arg0: i32) -> (i32, i32, i32) {
    %c0_i32 = arith.constant 0 : i32
    %c0_i32_0 = arith.constant 0 : i32
    %c0_i32_1 = arith.constant 0 : i32
    %c0_i32_2 = arith.constant 0 : i32
    return %c0_i32, %c0_i32_0, %c0_i32_1 : i32, i32, i32
  }
  func.func @transform_2(%arg0: i32) -> (i32, i32) {
    %c0_i32 = arith.constant 0 : i32
    %c0_i32_0 = arith.constant 0 : i32
    %c0_i32_1 = arith.constant 0 : i32
    return %c0_i32, %c0_i32_0 : i32, i32
  }
  func.func @transform_3(%arg0: i32) -> (i32, i32, i32) {
    %c0_i32 = arith.constant 0 : i32
    %c0_i32_0 = arith.constant 0 : i32
    %c0_i32_1 = arith.constant 0 : i32
    return %arg0, %c0_i32, %c0_i32_0 : i32, i32, i32
  }
  func.func @transform_4(%arg0: i32) -> (i32, i32) {
    %c0_i32 = arith.constant 0 : i32
    %c0_i32_0 = arith.constant 0 : i32
    %c0_i32_1 = arith.constant 0 : i32
    return %c0_i32, %c0_i32_0 : i32, i32
  }
  func.func @transform_5(%arg0: i32) -> (i32, i32) {
    %c0_i32 = arith.constant 0 : i32
    %c0_i32_0 = arith.constant 0 : i32
    %c0_i32_1 = arith.constant 0 : i32
    return %c0_i32, %c0_i32_0 : i32, i32
  }
  func.func @transform_6(%arg0: i32) -> (i32, i32, i32) {
    %c0_i32 = arith.constant 0 : i32
    %c0_i32_0 = arith.constant 0 : i32
    %c0_i32_1 = arith.constant 0 : i32
    return %arg0, %c0_i32, %c0_i32_0 : i32, i32, i32
  }
}

</mosaic_0001>

<llo_original>
// kernel: tpu_custom_call.1
$region0: #{tpu_custom_call.1}
  #allocation0 [shape = 'u32[]', space=smem, size = 0x4, offset = 0x4, fixed_abs, tag = 'smem constant byte address 0x4 - core index']
  #allocation1 [shape = 'u32[144,128]{1,0:T(1,128)}', space=vmem, size = 0x12000, scoped, tag = 'internal scratch']
  %s0 = inlined_call_operand.vmem [shape: f32[2,4,256], index: 0, kind: input, shape index: {}]
  %s1 = inlined_call_operand.vmem [shape: f32[9,16,4], index: 1, kind: input, shape index: {}]
  %s2 = inlined_call_operand.vmem [shape: f32[3,256], index: 2, kind: input, shape index: {}]
  %s3 = inlined_call_operand.vmem [shape: f32[2,16,5], index: 3, kind: input, shape index: {}]
  %s4 = inlined_call_operand.vmem [shape: f32[8,16], index: 4, kind: input, shape index: {}]
  %s5 = inlined_call_operand.vmem [shape: f32[16,8], index: 5, kind: input, shape index: {}]
  %s6 = inlined_call_operand.hbm [shape: f32[2,16,256], index: 6, kind: output, shape index: {}]
  %s7 = sld [smem:[#allocation0]]
  $region57: #{tpu_custom_call.1} parent=0
    _
  %s9 = ssub.s32 1, %s7
  %s10 = scalar_select 0, %s9, %s7
  $region1: #{tpu_custom_call.1} parent=0
    #allocation2 [shape = 'u8[32768]{0}', space=vmem, size = 0x8000, scoped, tag = 'output window, operand 0']
    #allocation3 [shape = 's32[2]{0}', space=sflag, size = 0x8, scoped, tag = 'scoped memory for tpu_custom_call.1']
    %11 = vsyncpa [#allocation3], 0
    %s12 = scalar_lea.sflag [#allocation3], 1
    %13 = vsyncpa %s12, 0
    loop: start=0, step=1, limit=4
    $region2: #{tpu_custom_call.1} parent=1 // loop_pre_header
      _
    $region3: #{tpu_custom_call.1} parent=1 // loop_header
      %s15 = sphi 0, %s19
      %p16 = scmp.ge.s32.totalorder %s15, 4
      %s25 = sphi 0, %s27
      %s28 = sphi 0, %s25
      %s29 = sphi 0, %s28
      %s45 = sphi 0, %s29
      %s49 = sphi 0, %s49
      %s51 = sphi 0, %s49
      %s52 = sphi 0, %s51
      %s66 = sphi 0, %s52
      %s70 = sphi 0, %s70
      %s72 = sphi 0, %s70
      %s73 = sphi 0, %s72
      %s87 = sphi 0, %s73
      %s93 = sphi 0, %s95
      %s96 = sphi 0, %s93
      %s97 = sphi 0, %s96
      %s113 = sphi 0, %s97
      %s117 = sphi 0, %s117
      %s119 = sphi 0, %s117
      %s120 = sphi 0, %s119
      %s134 = sphi 0, %s120
      %s138 = sphi 0, %s138
      %s140 = sphi 0, %s138
      %s141 = sphi 0, %s140
      %s155 = sphi 0, %s141
      %s161 = sphi 0, %s163
      %s164 = sphi 0, %s161
      %s165 = sphi 0, %s164
      %s181 = sphi 0, %s165
    $region4: #{tpu_custom_call.1} parent=1 // loop_header_branch
      %18 = sbr.rel (%p16) target = $region8
    $region5: #{tpu_custom_call.1} parent=1 // loop_body
      %s20 = ssub.s32 %s15, 1
      %s21 = ssub.s32 %s15, 2
      %s22 = sadd.s32 %s15, 1
      %s23 = ssub.s32 %s15, %s22
      %p24 = scmp.eq.s32.totalorder %s23, 0
      %s26 = sadd.s32 %s25, 1
      %s27 = scalar_select %p24, %s25, %s26
      %p30 = pneg %p24
      %p31 = scmp.eq.s32.totalorder %s15, 1
      %p32 = por %p30, %p31
      %p33 = scmp.ne.s32.totalorder %s25, %s28
      %p34 = scmp.eq.s32.totalorder %s15, 0
      %p35 = por %p33, %p34
      %p36 = scmp.ne.s32.totalorder %s25, %s28
      %p37 = scmp.eq.s32.totalorder %s20, 1
      %p38 = por %p36, %p37
      %p39 = scmp.ne.s32.totalorder %s28, %s29
      %p40 = scmp.eq.s32.totalorder %s20, 0
      %p41 = por %p39, %p40
      %p42 = scmp.ne.s32.totalorder %s28, %s29
      %p43 = scmp.eq.s32.totalorder %s21, 1
      %p44 = por %p42, %p43
      %p46 = scmp.ne.s32.totalorder %s29, %s45
      %p47 = scmp.eq.s32.totalorder %s21, 0
      %p48 = por %p46, %p47
      %s50 = sadd.s32 %s49, 1
      %p53 = scmp.eq.s32.totalorder %s15, 1
      %p54 = scmp.ne.s32.totalorder %s49, %s51
      %p55 = scmp.eq.s32.totalorder %s15, 0
      %p56 = por %p54, %p55
      %p57 = scmp.ne.s32.totalorder %s49, %s51
      %p58 = scmp.eq.s32.totalorder %s20, 1
      %p59 = por %p57, %p58
      %p60 = scmp.ne.s32.totalorder %s51, %s52
      %p61 = scmp.eq.s32.totalorder %s20, 0
      %p62 = por %p60, %p61
      %p63 = scmp.ne.s32.totalorder %s51, %s52
      %p64 = scmp.eq.s32.totalorder %s21, 1
      %p65 = por %p63, %p64
      %p67 = scmp.ne.s32.totalorder %s52, %s66
      %p68 = scmp.eq.s32.totalorder %s21, 0
      %p69 = por %p67, %p68
      %s71 = sadd.s32 %s70, 1
      %p74 = scmp.eq.s32.totalorder %s15, 1
      %p75 = scmp.ne.s32.totalorder %s70, %s72
      %p76 = scmp.eq.s32.totalorder %s15, 0
      %p77 = por %p75, %p76
      %p78 = scmp.ne.s32.totalorder %s70, %s72
      %p79 = scmp.eq.s32.totalorder %s20, 1
      %p80 = por %p78, %p79
      %p81 = scmp.ne.s32.totalorder %s72, %s73
      %p82 = scmp.eq.s32.totalorder %s20, 0
      %p83 = por %p81, %p82
      %p84 = scmp.ne.s32.totalorder %s72, %s73
      %p85 = scmp.eq.s32.totalorder %s21, 1
      %p86 = por %p84, %p85
      %p88 = scmp.ne.s32.totalorder %s73, %s87
      %p89 = scmp.eq.s32.totalorder %s21, 0
      %p90 = por %p88, %p89
      %s91 = ssub.s32 %s15, %s22
      %p92 = scmp.eq.s32.totalorder %s91, 0
      %s94 = sadd.s32 %s93, 1
      %s95 = scalar_select %p92, %s93, %s94
      %p98 = pneg %p92
      %p99 = scmp.eq.s32.totalorder %s15, 1
      %p100 = por %p98, %p99
      %p101 = scmp.ne.s32.totalorder %s93, %s96
      %p102 = scmp.eq.s32.totalorder %s15, 0
      %p103 = por %p101, %p102
      %p104 = scmp.ne.s32.totalorder %s93, %s96
      %p105 = scmp.eq.s32.totalorder %s20, 1
      %p106 = por %p104, %p105
      %p107 = scmp.ne.s32.totalorder %s96, %s97
      %p108 = scmp.eq.s32.totalorder %s20, 0
      %p109 = por %p107, %p108
      %p110 = scmp.ne.s32.totalorder %s96, %s97
      %p111 = scmp.eq.s32.totalorder %s21, 1
      %p112 = por %p110, %p111
      %p114 = scmp.ne.s32.totalorder %s97, %s113
      %p115 = scmp.eq.s32.totalorder %s21, 0
      %p116 = por %p114, %p115
      %s118 = sadd.s32 %s117, 1
      %p121 = scmp.eq.s32.totalorder %s15, 1
      %p122 = scmp.ne.s32.totalorder %s117, %s119
      %p123 = scmp.eq.s32.totalorder %s15, 0
      %p124 = por %p122, %p123
      %p125 = scmp.ne.s32.totalorder %s117, %s119
      %p126 = scmp.eq.s32.totalorder %s20, 1
      %p127 = por %p125, %p126
      %p128 = scmp.ne.s32.totalorder %s119, %s120
      %p129 = scmp.eq.s32.totalorder %s20, 0
      %p130 = por %p128, %p129
      %p131 = scmp.ne.s32.totalorder %s119, %s120
      %p132 = scmp.eq.s32.totalorder %s21, 1
      %p133 = por %p131, %p132
      %p135 = scmp.ne.s32.totalorder %s120, %s134
      %p136 = scmp.eq.s32.totalorder %s21, 0
      %p137 = por %p135, %p136
      %s139 = sadd.s32 %s138, 1
      %p142 = scmp.eq.s32.totalorder %s15, 1
      %p143 = scmp.ne.s32.totalorder %s138, %s140
      %p144 = scmp.eq.s32.totalorder %s15, 0
      %p145 = por %p143, %p144
      %p146 = scmp.ne.s32.totalorder %s138, %s140
      %p147 = scmp.eq.s32.totalorder %s20, 1
      %p148 = por %p146, %p147
      %p149 = scmp.ne.s32.totalorder %s140, %s141
      %p150 = scmp.eq.s32.totalorder %s20, 0
      %p151 = por %p149, %p150
      %p152 = scmp.ne.s32.totalorder %s140, %s141
      %p153 = scmp.eq.s32.totalorder %s21, 1
      %p154 = por %p152, %p153
      %p156 = scmp.ne.s32.totalorder %s141, %s155
      %p157 = scmp.eq.s32.totalorder %s21, 0
      %p158 = por %p156, %p157
      %s159 = ssub.s32 %s15, %s22
      %p160 = scmp.eq.s32.totalorder %s159, 0
      %s162 = sadd.s32 %s161, 1
      %s163 = scalar_select %p160, %s161, %s162
      %p166 = pneg %p160
      %p167 = scmp.eq.s32.totalorder %s15, 1
      %p168 = por %p166, %p167
      %p169 = scmp.ne.s32.totalorder %s161, %s164
      %p170 = scmp.eq.s32.totalorder %s15, 0
      %p171 = por %p169, %p170
      %p172 = scmp.ne.s32.totalorder %s161, %s164
      %p173 = scmp.eq.s32.totalorder %s20, 1
      %p174 = por %p172, %p173
      %p175 = scmp.ne.s32.totalorder %s164, %s165
      %p176 = scmp.eq.s32.totalorder %s20, 0
      %p177 = por %p175, %p176
      %p178 = scmp.ne.s32.totalorder %s164, %s165
      %p179 = scmp.eq.s32.totalorder %s21, 1
      %p180 = por %p178, %p179
      %p182 = scmp.ne.s32.totalorder %s165, %s181
      %p183 = scmp.eq.s32.totalorder %s21, 0
      %p184 = por %p182, %p183
      %p185 = scmp.le.s32.totalorder 1, %s15
      %p186 = scmp.lt.s32.totalorder %s15, 3
      %p187 = pnand %p185, %p186
      %p188 = pneg %p187
      // Predicated region
      $region9: #{tpu_custom_call.1} parent=5 // pred_check
        _
      $region10: #{tpu_custom_call.1} parent=5 // pred_check_branch
        %190 = sbr.rel (%p187) target = $region12
      $region11: #{tpu_custom_call.1} parent=5 // pred_region
        %s191 = ssub.s32 %s15, 1
        // Predicated region
        $region13: #{tpu_custom_call.1} parent=11 // pred_check
          %p192 = pneg %p62
        $region14: #{tpu_custom_call.1} parent=11 // pred_check_branch
          %194 = sbr.rel (%p192) target = $region16
        $region15: #{tpu_custom_call.1} parent=11 // pred_region
          _
        $region16: #{tpu_custom_call.1} parent=11 // pred_fallthru
          _
        // Predicated region
        $region17: #{tpu_custom_call.1} parent=11 // pred_check
          %p195 = pneg %p83
        $region18: #{tpu_custom_call.1} parent=11 // pred_check_branch
          %197 = sbr.rel (%p195) target = $region20
        $region19: #{tpu_custom_call.1} parent=11 // pred_region
          _
        $region20: #{tpu_custom_call.1} parent=11 // pred_fallthru
          _
        // Predicated region
        $region21: #{tpu_custom_call.1} parent=11 // pred_check
          %p198 = pneg %p130
        $region22: #{tpu_custom_call.1} parent=11 // pred_check_branch
          %200 = sbr.rel (%p198) target = $region24
        $region23: #{tpu_custom_call.1} parent=11 // pred_region
          _
        $region24: #{tpu_custom_call.1} parent=11 // pred_fallthru
          _
        // Predicated region
        $region25: #{tpu_custom_call.1} parent=11 // pred_check
          %p201 = pneg %p151
        $region26: #{tpu_custom_call.1} parent=11 // pred_check_branch
          %203 = sbr.rel (%p201) target = $region28
        $region27: #{tpu_custom_call.1} parent=11 // pred_region
          _
        $region28: #{tpu_custom_call.1} parent=11 // pred_fallthru
          _
      $region12: #{tpu_custom_call.1} parent=5 // pred_fallthru
        _
      %p204 = scmp.lt.s32.totalorder %s15, 2
      // Predicated region
      $region29: #{tpu_custom_call.1} parent=5 // pred_check
        %p205 = pneg %p204
      $region30: #{tpu_custom_call.1} parent=5 // pred_check_branch
        %207 = sbr.rel (%p205) target = $region32
      $region31: #{tpu_custom_call.1} parent=5 // pred_region
        // Predicated region
        $region33: #{tpu_custom_call.1} parent=31 // pred_check
          %p208 = pneg %p35
        $region34: #{tpu_custom_call.1} parent=31 // pred_check_branch
          %210 = sbr.rel (%p208) target = $region36
        $region35: #{tpu_custom_call.1} parent=31 // pred_region
          %p211 = scmp.lt.s32.totalorder %s15, 1
          %s212 = scalar_select %p211, %s15, 1
          %s213 = smul.addr %s212, 2
          %s214 = smul.addr %s213, 4
          %s215 = scalar_lea.vmem %s0, %s214
        $region36: #{tpu_custom_call.1} parent=31 // pred_fallthru
          _
        // Predicated region
        $region37: #{tpu_custom_call.1} parent=31 // pred_check
          %p216 = pneg %p103
        $region38: #{tpu_custom_call.1} parent=31 // pred_check_branch
          %218 = sbr.rel (%p216) target = $region40
        $region39: #{tpu_custom_call.1} parent=31 // pred_region
          %p219 = scmp.lt.s32.totalorder %s15, 1
          %s220 = scalar_select %p219, %s15, 1
          %s221 = smul.addr %s220, 2
          %s222 = smul.addr %s221, 8
          %s223 = scalar_lea.vmem %s3, %s222
        $region40: #{tpu_custom_call.1} parent=31 // pred_fallthru
          _
      $region32: #{tpu_custom_call.1} parent=5 // pred_fallthru
        _
      %p224 = scmp.le.s32.totalorder 1, %s15
      %p225 = scmp.lt.s32.totalorder %s15, 3
      %p226 = pnand %p224, %p225
      %p227 = pneg %p226
      // Predicated region
      $region41: #{tpu_custom_call.1} parent=5 // pred_check
        _
      $region42: #{tpu_custom_call.1} parent=5 // pred_check_branch
        %229 = sbr.rel (%p226) target = $region44
      $region43: #{tpu_custom_call.1} parent=5 // pred_region
        %s230 = ssub.s32 %s15, 1
        %p231 = scmp.lt.s32.totalorder %s20, 1
        %s232 = scalar_select %p231, %s20, 1
        %s233 = smul.addr %s232, 2
        %s234 = smul.addr %s233, 4
        %s235 = scalar_lea.vmem %s0, %s234
        %p236 = pneg %p41
        %p237 = pneg %p38
        %p238 = pneg %p62
        %p239 = pneg %p59
        %p240 = pneg %p83
        %p241 = pneg %p80
        %p242 = scmp.lt.s32.totalorder %s20, 1
        %s243 = scalar_select %p242, %s20, 1
        %s244 = smul.addr %s243, 2
        %s245 = smul.addr %s244, 8
        %s246 = scalar_lea.vmem %s3, %s245
        %p247 = pneg %p109
        %p248 = pneg %p106
        %p249 = pneg %p130
        %p250 = pneg %p127
        %p251 = pneg %p151
        %p252 = pneg %p148
        %p253 = pneg %p177
        %p254 = pneg %p174
        %s255 = sand.u32 %s164, 1
        %s256 = scalar_lea.sflag [#allocation3], %s255
        %s257 = sand.u32 %s164, 1
        %s258 = smul.addr %s257, 32
        %s259 = scalar_lea.vmem [#allocation2], %s258
        %p260 = scmp.lt.s32.totalorder %s20, 1
        %s261 = scalar_select %p260, %s20, 1
        %s262 = smul.addr %s261, 2
        %s263 = smul.addr %s262, 4
        %s264 = scalar_lea.vmem %s0, %s263
        %p265 = scmp.lt.s32.totalorder %s20, 1
        %s266 = scalar_select %p265, %s20, 1
        %s267 = smul.addr %s266, 2
        %s268 = smul.addr %s267, 8
        %s269 = scalar_lea.vmem %s3, %s268
        %v270 = vld [vmem:[%s264] sm:$0xff]
        %v271 = vld [vmem:[%s1] sm:$0xff]
        %v272 = vld [vmem:[%s1 + $0x8] sm:$0xff]
        %v273 = vld [vmem:[%s1 + $0x10] sm:$0xff]
        %v274 = vld [vmem:[%s1 + $0x18] sm:$0xff]
        %v275 = vld [vmem:[%s1 + $0x20] sm:$0xff]
        %v276 = vld [vmem:[%s1 + $0x28] sm:$0xff]
        %v277 = vld [vmem:[%s1 + $0x30] sm:$0xff]
        %v278 = vld [vmem:[%s1 + $0x38] sm:$0xff]
        %v279 = vld [vmem:[%s1 + $0x40] sm:$0xff]
        %v280 = vld [vmem:[%s1 + $0x48] sm:$0xff]
        %v281 = vld [vmem:[%s1 + $0x50] sm:$0xff]
        %v282 = vld [vmem:[%s1 + $0x58] sm:$0xff]
        %v283 = vld [vmem:[%s1 + $0x60] sm:$0xff]
        %v284 = vld [vmem:[%s1 + $0x68] sm:$0xff]
        %v285 = vld [vmem:[%s1 + $0x70] sm:$0xff]
        %v286 = vld [vmem:[%s1 + $0x78] sm:$0xff]
        %v287 = vld [vmem:[%s1 + $0x80] sm:$0xff]
        %v288 = vld [vmem:[%s1 + $0x88] sm:$0xff]
        %v289 = vld [vmem:[%s2] sm:$0x77]
        %v291 = vcombine.high %v270, %v270
        %v294 = vlaneseq
        %v295 = vshrl.u32 %v294, 7
        %v296 = vsub.s32 0, %v295
        %v297 = vrot.slane %v289, %v296
        %v298 = vlaneseq
        %v299 = vshrl.u32 %v298, 7
        %v300 = vsub.s32 4, %v299
        %v301 = vrot.slane %v289, %v300
        %v304 = vlaneseq
        %v305 = vshrl.u32 %v304, 7
        %v306 = vsub.s32 0, %v305
        %v307 = vrot.slane %v297, %v306
        %v308 = vlaneseq
        %v309 = vshrl.u32 %v308, 7
        %v310 = vsub.s32 0, %v309
        %v311 = vrot.slane %v301, %v310
        %314 = vrot.lane.b32.xlu0 %v307, 111
        %v315 = vpop.permute.xlu0 %314
        %316 = vrot.lane.b32.xlu0 %v311, 111
        %v317 = vpop.permute.xlu0 %316
        %vm318 = vcmask 908288
        %v319 = vsel %vm318, %v315, %v317
        %v323 = vmul.f32 %v315, 0.0
        %v324 = vmul.f32 %v270, %v319
        %v325 = vmul.f32 %v291, %v317
        %327 = vrot.lane.b32.xlu0 0.0, 16
        %v328 = vpop.permute.xlu0 %327
        %329 = vrot.lane.b32.xlu0 %v270, 16
        %v330 = vpop.permute.xlu0 %329
        %331 = vrot.lane.b32.xlu0 %v291, 16
        %v332 = vpop.permute.xlu0 %331
        %vm333 = vcmask 130048
        %v334 = vsel %vm333, %v328, %v330
        %v335 = vsel %vm333, %v330, %v332
        %vm336 = vcmask 31744
        %v338 = vsel %vm336, %v273, 0
        %v341 = vsel %vm336, %v274, 0
        %vm343 = vcmask 1043456
        %v344 = vsel %vm343, %v334, 0
        %v346 = vsel %vm343, %v335, 0
        %348 = vmatprep.subr.mxu0 %v346
        %349 = vmatpush1.msra.mxu0 %v344
        %350 = vmatprep.subr.mxu0 0.0
        %351 = vmatpush1.msra.mxu0 0.0
        %352 = vmatprep.subr.mxu0 0.0
        %353 = vmatpush1.msra.mxu0 0.0
        %354 = vmatprep.subr.mxu0 0.0
        %355 = vmatpush1.msra.mxu0 0.0
        %356 = vmatprep.subr.mxu0 0.0
        %357 = vmatpush1.msra.mxu0 0.0
        %358 = vmatprep.subr.mxu0 0.0
        %359 = vmatpush1.msra.mxu0 0.0
        %360 = vmatprep.subr.mxu0 0.0
        %361 = vmatpush1.msra.mxu0 0.0
        %362 = vmatprep.subr.mxu0 0.0
        %363 = vmatpush1.msra.mxu0 0.0
        %364 = vmatprep.subr.mxu0 0.0
        %365 = vmatpush1.msra.mxu0 0.0
        %366 = vmatprep.subr.mxu0 0.0
        %367 = vmatpush1.msra.mxu0 0.0
        %368 = vmatprep.subr.mxu0 0.0
        %369 = vmatpush1.msra.mxu0 0.0
        %370 = vmatprep.subr.mxu0 0.0
        %371 = vmatpush1.msra.mxu0 0.0
        %372 = vmatprep.subr.mxu0 0.0
        %373 = vmatpush1.msra.mxu0 0.0
        %374 = vmatprep.subr.mxu0 0.0
        %375 = vmatpush1.msra.mxu0 0.0
        %376 = vmatprep.subr.mxu0 0.0
        %377 = vmatpush1.msra.mxu0 0.0
        %378 = vmatprep.subr.mxu0 0.0
        %379 = vmatpush1.msra.mxu0 0.0
        %380 = vmatprep.subr.mxu0 0.0
        %381 = vmatpush1.msra.mxu0 0.0
        %382 = vmatprep.subr.mxu0 0.0
        %383 = vmatpush1.msra.mxu0 0.0
        %384 = vmatprep.subr.mxu0 0.0
        %385 = vmatpush1.msra.mxu0 0.0
        %386 = vmatprep.subr.mxu0 0.0
        %387 = vmatpush1.msra.mxu0 0.0
        %388 = vmatprep.subr.mxu0 0.0
        %389 = vmatpush1.msra.mxu0 0.0
        %390 = vmatprep.subr.mxu0 0.0
        %391 = vmatpush1.msra.mxu0 0.0
        %392 = vmatprep.subr.mxu0 0.0
        %393 = vmatpush1.msra.mxu0 0.0
        %394 = vmatprep.subr.mxu0 0.0
        %395 = vmatpush1.msra.mxu0 0.0
        %396 = vmatprep.subr.mxu0 0.0
        %397 = vmatpush1.msra.mxu0 0.0
        %398 = vmatprep.subr.mxu0 0.0
        %399 = vmatpush1.msra.mxu0 0.0
        %400 = vmatprep.subr.mxu0 0.0
        %401 = vmatpush1.msra.mxu0 0.0
        %402 = vmatprep.subr.mxu0 0.0
        %403 = vmatpush1.msra.mxu0 0.0
        %404 = vmatprep.subr.mxu0 0.0
        %405 = vmatpush1.msra.mxu0 0.0
        %406 = vmatprep.subr.mxu0 0.0
        %407 = vmatpush1.msra.mxu0 0.0
        %408 = vmatprep.subr.mxu0 0.0
        %409 = vmatpush1.msra.mxu0 0.0
        %410 = vmatprep.subr.mxu0 0.0
        %411 = vmatpush1.msra.mxu0 0.0
        %412 = vmatprep.mubr.f32.mxu0 0.0
        %413 = vmatmul.mubr.f32.gmra.mrb[0].mxu0 %v338
        %v414 = vpop.f32.mrb[0].mxu0
        %v415 = vadd.f32 0.0, %v414
        %v416 = vpop.f32.mrb[0].mxu0
        %v417 = vadd.f32 0.0, %v416
        %418 = vmatprep.mubr.f32.mxu0 0.0
        %419 = vmatmul.mubr.f32.gmra.mrb[0].mxu0 %v341
        %v420 = vpop.f32.mrb[0].mxu0
        %v421 = vadd.f32 0.0, %v420
        %v422 = vpop.f32.mrb[0].mxu0
        %v423 = vadd.f32 0.0, %v422
        %424 = vdwg.mxu0
        %428 = vrot.lane.b32.xlu0 %v323, 17
        %v429 = vpop.permute.xlu0 %428
        %430 = vrot.lane.b32.xlu0 %v324, 17
        %v431 = vpop.permute.xlu0 %430
        %432 = vrot.lane.b32.xlu0 %v325, 17
        %v433 = vpop.permute.xlu0 %432
        %vm434 = vcmask 138240
        %v435 = vsel %vm434, %v429, %v431
        %v436 = vsel %vm434, %v431, %v433
        %v438 = vsel %vm336, %v271, 0
        %v441 = vsel %vm336, %v272, 0
        %v443 = vsel %vm343, %v435, 0
        %v445 = vsel %vm343, %v436, 0
        %447 = vmatprep.subr.mxu0 %v445
        %448 = vmatpush1.msra.mxu0 %v443
        %449 = vmatprep.subr.mxu0 0.0
        %450 = vmatpush1.msra.mxu0 0.0
        %451 = vmatprep.subr.mxu0 0.0
        %452 = vmatpush1.msra.mxu0 0.0
        %453 = vmatprep.subr.mxu0 0.0
        %454 = vmatpush1.msra.mxu0 0.0
        %455 = vmatprep.subr.mxu0 0.0
        %456 = vmatpush1.msra.mxu0 0.0
        %457 = vmatprep.subr.mxu0 0.0
        %458 = vmatpush1.msra.mxu0 0.0
        %459 = vmatprep.subr.mxu0 0.0
        %460 = vmatpush1.msra.mxu0 0.0
        %461 = vmatprep.subr.mxu0 0.0
        %462 = vmatpush1.msra.mxu0 0.0
        %463 = vmatprep.subr.mxu0 0.0
        %464 = vmatpush1.msra.mxu0 0.0
        %465 = vmatprep.subr.mxu0 0.0
        %466 = vmatpush1.msra.mxu0 0.0
        %467 = vmatprep.subr.mxu0 0.0
        %468 = vmatpush1.msra.mxu0 0.0
        %469 = vmatprep.subr.mxu0 0.0
        %470 = vmatpush1.msra.mxu0 0.0
        %471 = vmatprep.subr.mxu0 0.0
        %472 = vmatpush1.msra.mxu0 0.0
        %473 = vmatprep.subr.mxu0 0.0
        %474 = vmatpush1.msra.mxu0 0.0
        %475 = vmatprep.subr.mxu0 0.0
        %476 = vmatpush1.msra.mxu0 0.0
        %477 = vmatprep.subr.mxu0 0.0
        %478 = vmatpush1.msra.mxu0 0.0
        %479 = vmatprep.subr.mxu0 0.0
        %480 = vmatpush1.msra.mxu0 0.0
        %481 = vmatprep.subr.mxu0 0.0
        %482 = vmatpush1.msra.mxu0 0.0
        %483 = vmatprep.subr.mxu0 0.0
        %484 = vmatpush1.msra.mxu0 0.0
        %485 = vmatprep.subr.mxu0 0.0
        %486 = vmatpush1.msra.mxu0 0.0
        %487 = vmatprep.subr.mxu0 0.0
        %488 = vmatpush1.msra.mxu0 0.0
        %489 = vmatprep.subr.mxu0 0.0
        %490 = vmatpush1.msra.mxu0 0.0
        %491 = vmatprep.subr.mxu0 0.0
        %492 = vmatpush1.msra.mxu0 0.0
        %493 = vmatprep.subr.mxu0 0.0
        %494 = vmatpush1.msra.mxu0 0.0
        %495 = vmatprep.subr.mxu0 0.0
        %496 = vmatpush1.msra.mxu0 0.0
        %497 = vmatprep.subr.mxu0 0.0
        %498 = vmatpush1.msra.mxu0 0.0
        %499 = vmatprep.subr.mxu0 0.0
        %500 = vmatpush1.msra.mxu0 0.0
        %501 = vmatprep.subr.mxu0 0.0
        %502 = vmatpush1.msra.mxu0 0.0
        %503 = vmatprep.subr.mxu0 0.0
        %504 = vmatpush1.msra.mxu0 0.0
        %505 = vmatprep.subr.mxu0 0.0
        %506 = vmatpush1.msra.mxu0 0.0
        %507 = vmatprep.subr.mxu0 0.0
        %508 = vmatpush1.msra.mxu0 0.0
        %509 = vmatprep.subr.mxu0 0.0
        %510 = vmatpush1.msra.mxu0 0.0
        %511 = vmatprep.mubr.f32.mxu0 0.0
        %512 = vmatmul.mubr.f32.gmra.mrb[0].mxu0 %v438
        %v513 = vpop.f32.mrb[0].mxu0
        %v514 = vadd.f32 %v415, %v513
        %v515 = vpop.f32.mrb[0].mxu0
        %v516 = vadd.f32 %v417, %v515
        %517 = vmatprep.mubr.f32.mxu0 0.0
        %518 = vmatmul.mubr.f32.gmra.mrb[0].mxu0 %v441
        %v519 = vpop.f32.mrb[0].mxu0
        %v520 = vadd.f32 %v421, %v519
        %v521 = vpop.f32.mrb[0].mxu0
        %v522 = vadd.f32 %v423, %v521
        %523 = vdwg.mxu0
        %v524 = vlaneseq
        %v525 = vshrl.u32 %v524, 7
        %v526 = vsub.s32 2, %v525
        %v527 = vrot.slane %v289, %v526
        %v528 = vlaneseq
        %v529 = vshrl.u32 %v528, 7
        %v530 = vsub.s32 6, %v529
        %v531 = vrot.slane %v289, %v530
        %v534 = vlaneseq
        %v535 = vshrl.u32 %v534, 7
        %v536 = vsub.s32 2, %v535
        %v537 = vrot.slane %v527, %v536
        %v538 = vlaneseq
        %v539 = vshrl.u32 %v538, 7
        %v540 = vsub.s32 2, %v539
        %v541 = vrot.slane %v531, %v540
        %544 = vrot.lane.b32.xlu0 %v537, 113
        %v545 = vpop.permute.xlu0 %544
        %546 = vrot.lane.b32.xlu0 %v541, 113
        %v547 = vpop.permute.xlu0 %546
        %vm548 = vcmask 924672
        %v549 = vsel %vm548, %v545, %v547
        %v553 = vmul.f32 %v545, 0.0
        %v554 = vmul.f32 %v270, %v549
        %v555 = vmul.f32 %v291, %v547
        %559 = vrot.lane.b32.xlu0 %v553, 15
        %v560 = vpop.permute.xlu0 %559
        %561 = vrot.lane.b32.xlu0 %v554, 15
        %v562 = vpop.permute.xlu0 %561
        %563 = vrot.lane.b32.xlu0 %v555, 15
        %v564 = vpop.permute.xlu0 %563
        %vm565 = vcmask 121856
        %v566 = vsel %vm565, %v560, %v562
        %v567 = vsel %vm565, %v562, %v564
        %v569 = vsel %vm336, %v275, 0
        %v572 = vsel %vm336, %v276, 0
        %v574 = vsel %vm343, %v566, 0
        %v576 = vsel %vm343, %v567, 0
        %578 = vmatprep.subr.mxu0 %v576
        %579 = vmatpush1.msra.mxu0 %v574
        %580 = vmatprep.subr.mxu0 0.0
        %581 = vmatpush1.msra.mxu0 0.0
        %582 = vmatprep.subr.mxu0 0.0
        %583 = vmatpush1.msra.mxu0 0.0
        %584 = vmatprep.subr.mxu0 0.0
        %585 = vmatpush1.msra.mxu0 0.0
        %586 = vmatprep.subr.mxu0 0.0
        %587 = vmatpush1.msra.mxu0 0.0
        %588 = vmatprep.subr.mxu0 0.0
        %589 = vmatpush1.msra.mxu0 0.0
        %590 = vmatprep.subr.mxu0 0.0
        %591 = vmatpush1.msra.mxu0 0.0
        %592 = vmatprep.subr.mxu0 0.0
        %593 = vmatpush1.msra.mxu0 0.0
        %594 = vmatprep.subr.mxu0 0.0
        %595 = vmatpush1.msra.mxu0 0.0
        %596 = vmatprep.subr.mxu0 0.0
        %597 = vmatpush1.msra.mxu0 0.0
        %598 = vmatprep.subr.mxu0 0.0
        %599 = vmatpush1.msra.mxu0 0.0
        %600 = vmatprep.subr.mxu0 0.0
        %601 = vmatpush1.msra.mxu0 0.0
        %602 = vmatprep.subr.mxu0 0.0
        %603 = vmatpush1.msra.mxu0 0.0
        %604 = vmatprep.subr.mxu0 0.0
        %605 = vmatpush1.msra.mxu0 0.0
        %606 = vmatprep.subr.mxu0 0.0
        %607 = vmatpush1.msra.mxu0 0.0
        %608 = vmatprep.subr.mxu0 0.0
        %609 = vmatpush1.msra.mxu0 0.0
        %610 = vmatprep.subr.mxu0 0.0
        %611 = vmatpush1.msra.mxu0 0.0
        %612 = vmatprep.subr.mxu0 0.0
        %613 = vmatpush1.msra.mxu0 0.0
        %614 = vmatprep.subr.mxu0 0.0
        %615 = vmatpush1.msra.mxu0 0.0
        %616 = vmatprep.subr.mxu0 0.0
        %617 = vmatpush1.msra.mxu0 0.0
        %618 = vmatprep.subr.mxu0 0.0
        %619 = vmatpush1.msra.mxu0 0.0
        %620 = vmatprep.subr.mxu0 0.0
        %621 = vmatpush1.msra.mxu0 0.0
        %622 = vmatprep.subr.mxu0 0.0
        %623 = vmatpush1.msra.mxu0 0.0
        %624 = vmatprep.subr.mxu0 0.0
        %625 = vmatpush1.msra.mxu0 0.0
        %626 = vmatprep.subr.mxu0 0.0
        %627 = vmatpush1.msra.mxu0 0.0
        %628 = vmatprep.subr.mxu0 0.0
        %629 = vmatpush1.msra.mxu0 0.0
        %630 = vmatprep.subr.mxu0 0.0
        %631 = vmatpush1.msra.mxu0 0.0
        %632 = vmatprep.subr.mxu0 0.0
        %633 = vmatpush1.msra.mxu0 0.0
        %634 = vmatprep.subr.mxu0 0.0
        %635 = vmatpush1.msra.mxu0 0.0
        %636 = vmatprep.subr.mxu0 0.0
        %637 = vmatpush1.msra.mxu0 0.0
        %638 = vmatprep.subr.mxu0 0.0
        %639 = vmatpush1.msra.mxu0 0.0
        %640 = vmatprep.subr.mxu0 0.0
        %641 = vmatpush1.msra.mxu0 0.0
        %642 = vmatprep.mubr.f32.mxu0 0.0
        %643 = vmatmul.mubr.f32.gmra.mrb[0].mxu0 %v569
        %v644 = vpop.f32.mrb[0].mxu0
        %v645 = vadd.f32 0.0, %v644
        %v646 = vpop.f32.mrb[0].mxu0
        %v647 = vadd.f32 0.0, %v646
        %648 = vmatprep.mubr.f32.mxu0 0.0
        %649 = vmatmul.mubr.f32.gmra.mrb[0].mxu0 %v572
        %v650 = vpop.f32.mrb[0].mxu0
        %v651 = vadd.f32 0.0, %v650
        %v652 = vpop.f32.mrb[0].mxu0
        %v653 = vadd.f32 0.0, %v652
        %654 = vdwg.mxu0
        %v655 = vadd.f32 %v514, %v645
        %v656 = vadd.f32 %v516, %v647
        %v657 = vadd.f32 %v520, %v651
        %v658 = vadd.f32 %v522, %v653
        %659 = vrot.lane.b32.xlu0 %v307, 127
        %v660 = vpop.permute.xlu0 %659
        %661 = vrot.lane.b32.xlu0 %v311, 127
        %v662 = vpop.permute.xlu0 %661
        %vm663 = vcmask 1039360
        %v664 = vsel %vm663, %v660, %v662
        %v668 = vmul.f32 %v660, 0.0
        %v669 = vmul.f32 %v270, %v664
        %v670 = vmul.f32 %v291, %v662
        %674 = vrot.lane.b32.xlu0 %v668, 1
        %v675 = vpop.permute.xlu0 %674
        %676 = vrot.lane.b32.xlu0 %v669, 1
        %v677 = vpop.permute.xlu0 %676
        %678 = vrot.lane.b32.xlu0 %v670, 1
        %v679 = vpop.permute.xlu0 %678
        %vm680 = vcmask 7168
        %v681 = vsel %vm680, %v675, %v677
        %v682 = vsel %vm680, %v677, %v679
        %v684 = vsel %vm336, %v277, 0
        %v687 = vsel %vm336, %v278, 0
        %v689 = vsel %vm343, %v681, 0
        %v691 = vsel %vm343, %v682, 0
        %693 = vmatprep.subr.mxu0 %v691
        %694 = vmatpush1.msra.mxu0 %v689
        %695 = vmatprep.subr.mxu0 0.0
        %696 = vmatpush1.msra.mxu0 0.0
        %697 = vmatprep.subr.mxu0 0.0
        %698 = vmatpush1.msra.mxu0 0.0
        %699 = vmatprep.subr.mxu0 0.0
        %700 = vmatpush1.msra.mxu0 0.0
        %701 = vmatprep.subr.mxu0 0.0
        %702 = vmatpush1.msra.mxu0 0.0
        %703 = vmatprep.subr.mxu0 0.0
        %704 = vmatpush1.msra.mxu0 0.0
        %705 = vmatprep.subr.mxu0 0.0
        %706 = vmatpush1.msra.mxu0 0.0
        %707 = vmatprep.subr.mxu0 0.0
        %708 = vmatpush1.msra.mxu0 0.0
        %709 = vmatprep.subr.mxu0 0.0
        %710 = vmatpush1.msra.mxu0 0.0
        %711 = vmatprep.subr.mxu0 0.0
        %712 = vmatpush1.msra.mxu0 0.0
        %713 = vmatprep.subr.mxu0 0.0
        %714 = vmatpush1.msra.mxu0 0.0
        %715 = vmatprep.subr.mxu0 0.0
        %716 = vmatpush1.msra.mxu0 0.0
        %717 = vmatprep.subr.mxu0 0.0
        %718 = vmatpush1.msra.mxu0 0.0
        %719 = vmatprep.subr.mxu0 0.0
        %720 = vmatpush1.msra.mxu0 0.0
        %721 = vmatprep.subr.mxu0 0.0
        %722 = vmatpush1.msra.mxu0 0.0
        %723 = vmatprep.subr.mxu0 0.0
        %724 = vmatpush1.msra.mxu0 0.0
        %725 = vmatprep.subr.mxu0 0.0
        %726 = vmatpush1.msra.mxu0 0.0
        %727 = vmatprep.subr.mxu0 0.0
        %728 = vmatpush1.msra.mxu0 0.0
        %729 = vmatprep.subr.mxu0 0.0
        %730 = vmatpush1.msra.mxu0 0.0
        %731 = vmatprep.subr.mxu0 0.0
        %732 = vmatpush1.msra.mxu0 0.0
        %733 = vmatprep.subr.mxu0 0.0
        %734 = vmatpush1.msra.mxu0 0.0
        %735 = vmatprep.subr.mxu0 0.0
        %736 = vmatpush1.msra.mxu0 0.0
        %737 = vmatprep.subr.mxu0 0.0
        %738 = vmatpush1.msra.mxu0 0.0
        %739 = vmatprep.subr.mxu0 0.0
        %740 = vmatpush1.msra.mxu0 0.0
        %741 = vmatprep.subr.mxu0 0.0
        %742 = vmatpush1.msra.mxu0 0.0
        %743 = vmatprep.subr.mxu0 0.0
        %744 = vmatpush1.msra.mxu0 0.0
        %745 = vmatprep.subr.mxu0 0.0
        %746 = vmatpush1.msra.mxu0 0.0
        %747 = vmatprep.subr.mxu0 0.0
        %748 = vmatpush1.msra.mxu0 0.0
        %749 = vmatprep.subr.mxu0 0.0
        %750 = vmatpush1.msra.mxu0 0.0
        %751 = vmatprep.subr.mxu0 0.0
        %752 = vmatpush1.msra.mxu0 0.0
        %753 = vmatprep.subr.mxu0 0.0
        %754 = vmatpush1.msra.mxu0 0.0
        %755 = vmatprep.subr.mxu0 0.0
        %756 = vmatpush1.msra.mxu0 0.0
        %757 = vmatprep.mubr.f32.mxu0 0.0
        %758 = vmatmul.mubr.f32.gmra.mrb[0].mxu0 %v684
        %v759 = vpop.f32.mrb[0].mxu0
        %v760 = vadd.f32 0.0, %v759
        %v761 = vpop.f32.mrb[0].mxu0
        %v762 = vadd.f32 0.0, %v761
        %763 = vmatprep.mubr.f32.mxu0 0.0
        %764 = vmatmul.mubr.f32.gmra.mrb[0].mxu0 %v687
        %v765 = vpop.f32.mrb[0].mxu0
        %v766 = vadd.f32 0.0, %v765
        %v767 = vpop.f32.mrb[0].mxu0
        %v768 = vadd.f32 0.0, %v767
        %769 = vdwg.mxu0
        %v770 = vadd.f32 %v655, %v760
        %v771 = vadd.f32 %v656, %v762
        %v772 = vadd.f32 %v657, %v766
        %v773 = vadd.f32 %v658, %v768
        %v775 = vsel %vm336, %v279, 0
        %v778 = vsel %vm336, %v280, 0
        %v780 = vsel %vm343, %v270, 0
        %v782 = vsel %vm343, %v291, 0
        %784 = vmatprep.subr.mxu0 %v782
        %785 = vmatpush1.msra.mxu0 %v780
        %786 = vmatprep.subr.mxu0 0.0
        %787 = vmatpush1.msra.mxu0 0.0
        %788 = vmatprep.subr.mxu0 0.0
        %789 = vmatpush1.msra.mxu0 0.0
        %790 = vmatprep.subr.mxu0 0.0
        %791 = vmatpush1.msra.mxu0 0.0
        %792 = vmatprep.subr.mxu0 0.0
        %793 = vmatpush1.msra.mxu0 0.0
        %794 = vmatprep.subr.mxu0 0.0
        %795 = vmatpush1.msra.mxu0 0.0
        %796 = vmatprep.subr.mxu0 0.0
        %797 = vmatpush1.msra.mxu0 0.0
        %798 = vmatprep.subr.mxu0 0.0
        %799 = vmatpush1.msra.mxu0 0.0
        %800 = vmatprep.subr.mxu0 0.0
        %801 = vmatpush1.msra.mxu0 0.0
        %802 = vmatprep.subr.mxu0 0.0
        %803 = vmatpush1.msra.mxu0 0.0
        %804 = vmatprep.subr.mxu0 0.0
        %805 = vmatpush1.msra.mxu0 0.0
        %806 = vmatprep.subr.mxu0 0.0
        %807 = vmatpush1.msra.mxu0 0.0
        %808 = vmatprep.subr.mxu0 0.0
        %809 = vmatpush1.msra.mxu0 0.0
        %810 = vmatprep.subr.mxu0 0.0
        %811 = vmatpush1.msra.mxu0 0.0
        %812 = vmatprep.subr.mxu0 0.0
        %813 = vmatpush1.msra.mxu0 0.0
        %814 = vmatprep.subr.mxu0 0.0
        %815 = vmatpush1.msra.mxu0 0.0
        %816 = vmatprep.subr.mxu0 0.0
        %817 = vmatpush1.msra.mxu0 0.0
        %818 = vmatprep.subr.mxu0 0.0
        %819 = vmatpush1.msra.mxu0 0.0
        %820 = vmatprep.subr.mxu0 0.0
        %821 = vmatpush1.msra.mxu0 0.0
        %822 = vmatprep.subr.mxu0 0.0
        %823 = vmatpush1.msra.mxu0 0.0
        %824 = vmatprep.subr.mxu0 0.0
        %825 = vmatpush1.msra.mxu0 0.0
        %826 = vmatprep.subr.mxu0 0.0
        %827 = vmatpush1.msra.mxu0 0.0
        %828 = vmatprep.subr.mxu0 0.0
        %829 = vmatpush1.msra.mxu0 0.0
        %830 = vmatprep.subr.mxu0 0.0
        %831 = vmatpush1.msra.mxu0 0.0
        %832 = vmatprep.subr.mxu0 0.0
        %833 = vmatpush1.msra.mxu0 0.0
        %834 = vmatprep.subr.mxu0 0.0
        %835 = vmatpush1.msra.mxu0 0.0
        %836 = vmatprep.subr.mxu0 0.0
        %837 = vmatpush1.msra.mxu0 0.0
        %838 = vmatprep.subr.mxu0 0.0
        %839 = vmatpush1.msra.mxu0 0.0
        %840 = vmatprep.subr.mxu0 0.0
        %841 = vmatpush1.msra.mxu0 0.0
        %842 = vmatprep.subr.mxu0 0.0
        %843 = vmatpush1.msra.mxu0 0.0
        %844 = vmatprep.subr.mxu0 0.0
        %845 = vmatpush1.msra.mxu0 0.0
        %846 = vmatprep.subr.mxu0 0.0
        %847 = vmatpush1.msra.mxu0 0.0
        %848 = vmatprep.mubr.f32.mxu0 0.0
        %849 = vmatmul.mubr.f32.gmra.mrb[0].mxu0 %v775
        %v850 = vpop.f32.mrb[0].mxu0
        %v851 = vadd.f32 0.0, %v850
        %v852 = vpop.f32.mrb[0].mxu0
        %v853 = vadd.f32 0.0, %v852
        %854 = vmatprep.mubr.f32.mxu0 0.0
        %855 = vmatmul.mubr.f32.gmra.mrb[0].mxu0 %v778
        %v856 = vpop.f32.mrb[0].mxu0
        %v857 = vadd.f32 0.0, %v856
        %v858 = vpop.f32.mrb[0].mxu0
        %v859 = vadd.f32 0.0, %v858
        %860 = vdwg.mxu0
        %v861 = vadd.f32 %v770, %v851
        %v862 = vadd.f32 %v771, %v853
        %v863 = vadd.f32 %v772, %v857
        %v864 = vadd.f32 %v773, %v859
        %865 = vrot.lane.b32.xlu0 %v537, 1
        %v866 = vpop.permute.xlu0 %865
        %867 = vrot.lane.b32.xlu0 %v541, 1
        %v868 = vpop.permute.xlu0 %867
        %v869 = vsel %vm680, %v866, %v868
        %v873 = vmul.f32 %v270, %v866
        %v874 = vmul.f32 %v291, %v869
        %v875 = vmul.f32 %v868, 0.0
        %879 = vrot.lane.b32.xlu0 %v873, 127
        %v880 = vpop.permute.xlu0 %879
        %881 = vrot.lane.b32.xlu0 %v874, 127
        %v882 = vpop.permute.xlu0 %881
        %883 = vrot.lane.b32.xlu0 %v875, 127
        %v884 = vpop.permute.xlu0 %883
        %v885 = vsel %vm663, %v880, %v882
        %v886 = vsel %vm663, %v882, %v884
        %v888 = vsel %vm336, %v281, 0
        %v891 = vsel %vm336, %v282, 0
        %v893 = vsel %vm343, %v885, 0
        %v895 = vsel %vm343, %v886, 0
        %897 = vmatprep.subr.mxu0 %v895
        %898 = vmatpush1.msra.mxu0 %v893
        %899 = vmatprep.subr.mxu0 0.0
        %900 = vmatpush1.msra.mxu0 0.0
        %901 = vmatprep.subr.mxu0 0.0
        %902 = vmatpush1.msra.mxu0 0.0
        %903 = vmatprep.subr.mxu0 0.0
        %904 = vmatpush1.msra.mxu0 0.0
        %905 = vmatprep.subr.mxu0 0.0
        %906 = vmatpush1.msra.mxu0 0.0
        %907 = vmatprep.subr.mxu0 0.0
        %908 = vmatpush1.msra.mxu0 0.0
        %909 = vmatprep.subr.mxu0 0.0
        %910 = vmatpush1.msra.mxu0 0.0
        %911 = vmatprep.subr.mxu0 0.0
        %912 = vmatpush1.msra.mxu0 0.0
        %913 = vmatprep.subr.mxu0 0.0
        %914 = vmatpush1.msra.mxu0 0.0
        %915 = vmatprep.subr.mxu0 0.0
        %916 = vmatpush1.msra.mxu0 0.0
        %917 = vmatprep.subr.mxu0 0.0
        %918 = vmatpush1.msra.mxu0 0.0
        %919 = vmatprep.subr.mxu0 0.0
        %920 = vmatpush1.msra.mxu0 0.0
        %921 = vmatprep.subr.mxu0 0.0
        %922 = vmatpush1.msra.mxu0 0.0
        %923 = vmatprep.subr.mxu0 0.0
        %924 = vmatpush1.msra.mxu0 0.0
        %925 = vmatprep.subr.mxu0 0.0
        %926 = vmatpush1.msra.mxu0 0.0
        %927 = vmatprep.subr.mxu0 0.0
        %928 = vmatpush1.msra.mxu0 0.0
        %929 = vmatprep.subr.mxu0 0.0
        %930 = vmatpush1.msra.mxu0 0.0
        %931 = vmatprep.subr.mxu0 0.0
        %932 = vmatpush1.msra.mxu0 0.0
        %933 = vmatprep.subr.mxu0 0.0
        %934 = vmatpush1.msra.mxu0 0.0
        %935 = vmatprep.subr.mxu0 0.0
        %936 = vmatpush1.msra.mxu0 0.0
        %937 = vmatprep.subr.mxu0 0.0
        %938 = vmatpush1.msra.mxu0 0.0
        %939 = vmatprep.subr.mxu0 0.0
        %940 = vmatpush1.msra.mxu0 0.0
        %941 = vmatprep.subr.mxu0 0.0
        %942 = vmatpush1.msra.mxu0 0.0
        %943 = vmatprep.subr.mxu0 0.0
        %944 = vmatpush1.msra.mxu0 0.0
        %945 = vmatprep.subr.mxu0 0.0
        %946 = vmatpush1.msra.mxu0 0.0
        %947 = vmatprep.subr.mxu0 0.0
        %948 = vmatpush1.msra.mxu0 0.0
        %949 = vmatprep.subr.mxu0 0.0
        %950 = vmatpush1.msra.mxu0 0.0
        %951 = vmatprep.subr.mxu0 0.0
        %952 = vmatpush1.msra.mxu0 0.0
        %953 = vmatprep.subr.mxu0 0.0
        %954 = vmatpush1.msra.mxu0 0.0
        %955 = vmatprep.subr.mxu0 0.0
        %956 = vmatpush1.msra.mxu0 0.0
        %957 = vmatprep.subr.mxu0 0.0
        %958 = vmatpush1.msra.mxu0 0.0
        %959 = vmatprep.subr.mxu0 0.0
        %960 = vmatpush1.msra.mxu0 0.0
        %961 = vmatprep.mubr.f32.mxu0 0.0
        %962 = vmatmul.mubr.f32.gmra.mrb[0].mxu0 %v888
        %v963 = vpop.f32.mrb[0].mxu0
        %v964 = vadd.f32 0.0, %v963
        %v965 = vpop.f32.mrb[0].mxu0
        %v966 = vadd.f32 0.0, %v965
        %967 = vmatprep.mubr.f32.mxu0 0.0
        %968 = vmatmul.mubr.f32.gmra.mrb[0].mxu0 %v891
        %v969 = vpop.f32.mrb[0].mxu0
        %v970 = vadd.f32 0.0, %v969
        %v971 = vpop.f32.mrb[0].mxu0
        %v972 = vadd.f32 0.0, %v971
        %973 = vdwg.mxu0
        %v974 = vadd.f32 %v861, %v964
        %v975 = vadd.f32 %v862, %v966
        %v976 = vadd.f32 %v863, %v970
        %v977 = vadd.f32 %v864, %v972
        %978 = vrot.lane.b32.xlu0 %v307, 15
        %v979 = vpop.permute.xlu0 %978
        %980 = vrot.lane.b32.xlu0 %v311, 15
        %v981 = vpop.permute.xlu0 %980
        %v982 = vsel %vm565, %v979, %v981
        %v986 = vmul.f32 %v270, %v979
        %v987 = vmul.f32 %v291, %v982
        %v988 = vmul.f32 %v981, 0.0
        %992 = vrot.lane.b32.xlu0 %v986, 113
        %v993 = vpop.permute.xlu0 %992
        %994 = vrot.lane.b32.xlu0 %v987, 113
        %v995 = vpop.permute.xlu0 %994
        %996 = vrot.lane.b32.xlu0 %v988, 113
        %v997 = vpop.permute.xlu0 %996
        %v998 = vsel %vm548, %v993, %v995
        %v999 = vsel %vm548, %v995, %v997
        %v1001 = vsel %vm336, %v283, 0
        %v1004 = vsel %vm336, %v284, 0
        %v1006 = vsel %vm343, %v998, 0
        %v1008 = vsel %vm343, %v999, 0
        %1010 = vmatprep.subr.mxu0 %v1008
        %1011 = vmatpush1.msra.mxu0 %v1006
        %1012 = vmatprep.subr.mxu0 0.0
        %1013 = vmatpush1.msra.mxu0 0.0
        %1014 = vmatprep.subr.mxu0 0.0
        %1015 = vmatpush1.msra.mxu0 0.0
        %1016 = vmatprep.subr.mxu0 0.0
        %1017 = vmatpush1.msra.mxu0 0.0
        %1018 = vmatprep.subr.mxu0 0.0
        %1019 = vmatpush1.msra.mxu0 0.0
        %1020 = vmatprep.subr.mxu0 0.0
        %1021 = vmatpush1.msra.mxu0 0.0
        %1022 = vmatprep.subr.mxu0 0.0
        %1023 = vmatpush1.msra.mxu0 0.0
        %1024 = vmatprep.subr.mxu0 0.0
        %1025 = vmatpush1.msra.mxu0 0.0
        %1026 = vmatprep.subr.mxu0 0.0
        %1027 = vmatpush1.msra.mxu0 0.0
        %1028 = vmatprep.subr.mxu0 0.0
        %1029 = vmatpush1.msra.mxu0 0.0
        %1030 = vmatprep.subr.mxu0 0.0
        %1031 = vmatpush1.msra.mxu0 0.0
        %1032 = vmatprep.subr.mxu0 0.0
        %1033 = vmatpush1.msra.mxu0 0.0
        %1034 = vmatprep.subr.mxu0 0.0
        %1035 = vmatpush1.msra.mxu0 0.0
        %1036 = vmatprep.subr.mxu0 0.0
        %1037 = vmatpush1.msra.mxu0 0.0
        %1038 = vmatprep.subr.mxu0 0.0
        %1039 = vmatpush1.msra.mxu0 0.0
        %1040 = vmatprep.subr.mxu0 0.0
        %1041 = vmatpush1.msra.mxu0 0.0
        %1042 = vmatprep.subr.mxu0 0.0
        %1043 = vmatpush1.msra.mxu0 0.0
        %1044 = vmatprep.subr.mxu0 0.0
        %1045 = vmatpush1.msra.mxu0 0.0
        %1046 = vmatprep.subr.mxu0 0.0
        %1047 = vmatpush1.msra.mxu0 0.0
        %1048 = vmatprep.subr.mxu0 0.0
        %1049 = vmatpush1.msra.mxu0 0.0
        %1050 = vmatprep.subr.mxu0 0.0
        %1051 = vmatpush1.msra.mxu0 0.0
        %1052 = vmatprep.subr.mxu0 0.0
        %1053 = vmatpush1.msra.mxu0 0.0
        %1054 = vmatprep.subr.mxu0 0.0
        %1055 = vmatpush1.msra.mxu0 0.0
        %1056 = vmatprep.subr.mxu0 0.0
        %1057 = vmatpush1.msra.mxu0 0.0
        %1058 = vmatprep.subr.mxu0 0.0
        %1059 = vmatpush1.msra.mxu0 0.0
        %1060 = vmatprep.subr.mxu0 0.0
        %1061 = vmatpush1.msra.mxu0 0.0
        %1062 = vmatprep.subr.mxu0 0.0
        %1063 = vmatpush1.msra.mxu0 0.0
        %1064 = vmatprep.subr.mxu0 0.0
        %1065 = vmatpush1.msra.mxu0 0.0
        %1066 = vmatprep.subr.mxu0 0.0
        %1067 = vmatpush1.msra.mxu0 0.0
        %1068 = vmatprep.subr.mxu0 0.0
        %1069 = vmatpush1.msra.mxu0 0.0
        %1070 = vmatprep.subr.mxu0 0.0
        %1071 = vmatpush1.msra.mxu0 0.0
        %1072 = vmatprep.subr.mxu0 0.0
        %1073 = vmatpush1.msra.mxu0 0.0
        %1074 = vmatprep.mubr.f32.mxu0 0.0
        %1075 = vmatmul.mubr.f32.gmra.mrb[0].mxu0 %v1001
        %v1076 = vpop.f32.mrb[0].mxu0
        %v1077 = vadd.f32 0.0, %v1076
        %v1078 = vpop.f32.mrb[0].mxu0
        %v1079 = vadd.f32 0.0, %v1078
        %1080 = vmatprep.mubr.f32.mxu0 0.0
        %1081 = vmatmul.mubr.f32.gmra.mrb[0].mxu0 %v1004
        %v1082 = vpop.f32.mrb[0].mxu0
        %v1083 = vadd.f32 0.0, %v1082
        %v1084 = vpop.f32.mrb[0].mxu0
        %v1085 = vadd.f32 0.0, %v1084
        %1086 = vdwg.mxu0
        %v1087 = vadd.f32 %v974, %v1077
        %v1088 = vadd.f32 %v975, %v1079
        %v1089 = vadd.f32 %v976, %v1083
        %v1090 = vadd.f32 %v977, %v1085
        %1091 = vrot.lane.b32.xlu0 %v270, 112
        %v1092 = vpop.permute.xlu0 %1091
        %1093 = vrot.lane.b32.xlu0 %v291, 112
        %v1094 = vpop.permute.xlu0 %1093
        %1095 = vrot.lane.b32.xlu0 0.0, 112
        %v1096 = vpop.permute.xlu0 %1095
        %vm1097 = vcmask 916480
        %v1098 = vsel %vm1097, %v1092, %v1094
        %v1099 = vsel %vm1097, %v1094, %v1096
        %v1101 = vsel %vm336, %v285, 0
        %v1104 = vsel %vm336, %v286, 0
        %v1106 = vsel %vm343, %v1098, 0
        %v1108 = vsel %vm343, %v1099, 0
        %1110 = vmatprep.subr.mxu0 %v1108
        %1111 = vmatpush1.msra.mxu0 %v1106
        %1112 = vmatprep.subr.mxu0 0.0
        %1113 = vmatpush1.msra.mxu0 0.0
        %1114 = vmatprep.subr.mxu0 0.0
        %1115 = vmatpush1.msra.mxu0 0.0
        %1116 = vmatprep.subr.mxu0 0.0
        %1117 = vmatpush1.msra.mxu0 0.0
        %1118 = vmatprep.subr.mxu0 0.0
        %1119 = vmatpush1.msra.mxu0 0.0
        %1120 = vmatprep.subr.mxu0 0.0
        %1121 = vmatpush1.msra.mxu0 0.0
        %1122 = vmatprep.subr.mxu0 0.0
        %1123 = vmatpush1.msra.mxu0 0.0
        %1124 = vmatprep.subr.mxu0 0.0
        %1125 = vmatpush1.msra.mxu0 0.0
        %1126 = vmatprep.subr.mxu0 0.0
        %1127 = vmatpush1.msra.mxu0 0.0
        %1128 = vmatprep.subr.mxu0 0.0
        %1129 = vmatpush1.msra.mxu0 0.0
        %1130 = vmatprep.subr.mxu0 0.0
        %1131 = vmatpush1.msra.mxu0 0.0
        %1132 = vmatprep.subr.mxu0 0.0
        %1133 = vmatpush1.msra.mxu0 0.0
        %1134 = vmatprep.subr.mxu0 0.0
        %1135 = vmatpush1.msra.mxu0 0.0
        %1136 = vmatprep.subr.mxu0 0.0
        %1137 = vmatpush1.msra.mxu0 0.0
        %1138 = vmatprep.subr.mxu0 0.0
        %1139 = vmatpush1.msra.mxu0 0.0
        %1140 = vmatprep.subr.mxu0 0.0
        %1141 = vmatpush1.msra.mxu0 0.0
        %1142 = vmatprep.subr.mxu0 0.0
        %1143 = vmatpush1.msra.mxu0 0.0
        %1144 = vmatprep.subr.mxu0 0.0
        %1145 = vmatpush1.msra.mxu0 0.0
        %1146 = vmatprep.subr.mxu0 0.0
        %1147 = vmatpush1.msra.mxu0 0.0
        %1148 = vmatprep.subr.mxu0 0.0
        %1149 = vmatpush1.msra.mxu0 0.0
        %1150 = vmatprep.subr.mxu0 0.0
        %1151 = vmatpush1.msra.mxu0 0.0
        %1152 = vmatprep.subr.mxu0 0.0
        %1153 = vmatpush1.msra.mxu0 0.0
        %1154 = vmatprep.subr.mxu0 0.0
        %1155 = vmatpush1.msra.mxu0 0.0
        %1156 = vmatprep.subr.mxu0 0.0
        %1157 = vmatpush1.msra.mxu0 0.0
        %1158 = vmatprep.subr.mxu0 0.0
        %1159 = vmatpush1.msra.mxu0 0.0
        %1160 = vmatprep.subr.mxu0 0.0
        %1161 = vmatpush1.msra.mxu0 0.0
        %1162 = vmatprep.subr.mxu0 0.0
        %1163 = vmatpush1.msra.mxu0 0.0
        %1164 = vmatprep.subr.mxu0 0.0
        %1165 = vmatpush1.msra.mxu0 0.0
        %1166 = vmatprep.subr.mxu0 0.0
        %1167 = vmatpush1.msra.mxu0 0.0
        %1168 = vmatprep.subr.mxu0 0.0
        %1169 = vmatpush1.msra.mxu0 0.0
        %1170 = vmatprep.subr.mxu0 0.0
        %1171 = vmatpush1.msra.mxu0 0.0
        %1172 = vmatprep.subr.mxu0 0.0
        %1173 = vmatpush1.msra.mxu0 0.0
        %1174 = vmatprep.mubr.f32.mxu0 0.0
        %1175 = vmatmul.mubr.f32.gmra.mrb[0].mxu0 %v1101
        %v1176 = vpop.f32.mrb[0].mxu0
        %v1177 = vadd.f32 0.0, %v1176
        %v1178 = vpop.f32.mrb[0].mxu0
        %v1179 = vadd.f32 0.0, %v1178
        %1180 = vmatprep.mubr.f32.mxu0 0.0
        %1181 = vmatmul.mubr.f32.gmra.mrb[0].mxu0 %v1104
        %v1182 = vpop.f32.mrb[0].mxu0
        %v1183 = vadd.f32 0.0, %v1182
        %v1184 = vpop.f32.mrb[0].mxu0
        %v1185 = vadd.f32 0.0, %v1184
        %1186 = vdwg.mxu0
        %v1187 = vadd.f32 %v1087, %v1177
        %v1188 = vadd.f32 %v1088, %v1179
        %v1189 = vadd.f32 %v1089, %v1183
        %v1190 = vadd.f32 %v1090, %v1185
        %1191 = vrot.lane.b32.xlu0 %v537, 17
        %v1192 = vpop.permute.xlu0 %1191
        %1193 = vrot.lane.b32.xlu0 %v541, 17
        %v1194 = vpop.permute.xlu0 %1193
        %v1195 = vsel %vm434, %v1192, %v1194
        %v1199 = vmul.f32 %v270, %v1192
        %v1200 = vmul.f32 %v291, %v1195
        %v1201 = vmul.f32 %v1194, 0.0
        %1205 = vrot.lane.b32.xlu0 %v1199, 111
        %v1206 = vpop.permute.xlu0 %1205
        %1207 = vrot.lane.b32.xlu0 %v1200, 111
        %v1208 = vpop.permute.xlu0 %1207
        %1209 = vrot.lane.b32.xlu0 %v1201, 111
        %v1210 = vpop.permute.xlu0 %1209
        %v1211 = vsel %vm318, %v1206, %v1208
        %v1212 = vsel %vm318, %v1208, %v1210
        %v1214 = vsel %vm336, %v287, 0
        %v1217 = vsel %vm336, %v288, 0
        %v1219 = vsel %vm343, %v1211, 0
        %v1221 = vsel %vm343, %v1212, 0
        %1223 = vmatprep.subr.mxu0 %v1221
        %1224 = vmatpush1.msra.mxu0 %v1219
        %1225 = vmatprep.subr.mxu0 0.0
        %1226 = vmatpush1.msra.mxu0 0.0
        %1227 = vmatprep.subr.mxu0 0.0
        %1228 = vmatpush1.msra.mxu0 0.0
        %1229 = vmatprep.subr.mxu0 0.0
        %1230 = vmatpush1.msra.mxu0 0.0
        %1231 = vmatprep.subr.mxu0 0.0
        %1232 = vmatpush1.msra.mxu0 0.0
        %1233 = vmatprep.subr.mxu0 0.0
        %1234 = vmatpush1.msra.mxu0 0.0
        %1235 = vmatprep.subr.mxu0 0.0
        %1236 = vmatpush1.msra.mxu0 0.0
        %1237 = vmatprep.subr.mxu0 0.0
        %1238 = vmatpush1.msra.mxu0 0.0
        %1239 = vmatprep.subr.mxu0 0.0
        %1240 = vmatpush1.msra.mxu0 0.0
        %1241 = vmatprep.subr.mxu0 0.0
        %1242 = vmatpush1.msra.mxu0 0.0
        %1243 = vmatprep.subr.mxu0 0.0
        %1244 = vmatpush1.msra.mxu0 0.0
        %1245 = vmatprep.subr.mxu0 0.0
        %1246 = vmatpush1.msra.mxu0 0.0
        %1247 = vmatprep.subr.mxu0 0.0
        %1248 = vmatpush1.msra.mxu0 0.0
        %1249 = vmatprep.subr.mxu0 0.0
        %1250 = vmatpush1.msra.mxu0 0.0
        %1251 = vmatprep.subr.mxu0 0.0
        %1252 = vmatpush1.msra.mxu0 0.0
        %1253 = vmatprep.subr.mxu0 0.0
        %1254 = vmatpush1.msra.mxu0 0.0
        %1255 = vmatprep.subr.mxu0 0.0
        %1256 = vmatpush1.msra.mxu0 0.0
        %1257 = vmatprep.subr.mxu0 0.0
        %1258 = vmatpush1.msra.mxu0 0.0
        %1259 = vmatprep.subr.mxu0 0.0
        %1260 = vmatpush1.msra.mxu0 0.0
        %1261 = vmatprep.subr.mxu0 0.0
        %1262 = vmatpush1.msra.mxu0 0.0
        %1263 = vmatprep.subr.mxu0 0.0
        %1264 = vmatpush1.msra.mxu0 0.0
        %1265 = vmatprep.subr.mxu0 0.0
        %1266 = vmatpush1.msra.mxu0 0.0
        %1267 = vmatprep.subr.mxu0 0.0
        %1268 = vmatpush1.msra.mxu0 0.0
        %1269 = vmatprep.subr.mxu0 0.0
        %1270 = vmatpush1.msra.mxu0 0.0
        %1271 = vmatprep.subr.mxu0 0.0
        %1272 = vmatpush1.msra.mxu0 0.0
        %1273 = vmatprep.subr.mxu0 0.0
        %1274 = vmatpush1.msra.mxu0 0.0
        %1275 = vmatprep.subr.mxu0 0.0
        %1276 = vmatpush1.msra.mxu0 0.0
        %1277 = vmatprep.subr.mxu0 0.0
        %1278 = vmatpush1.msra.mxu0 0.0
        %1279 = vmatprep.subr.mxu0 0.0
        %1280 = vmatpush1.msra.mxu0 0.0
        %1281 = vmatprep.subr.mxu0 0.0
        %1282 = vmatpush1.msra.mxu0 0.0
        %1283 = vmatprep.subr.mxu0 0.0
        %1284 = vmatpush1.msra.mxu0 0.0
        %1285 = vmatprep.subr.mxu0 0.0
        %1286 = vmatpush1.msra.mxu0 0.0
        %1287 = vmatprep.mubr.f32.mxu0 0.0
        %1288 = vmatmul.mubr.f32.gmra.mrb[0].mxu0 %v1214
        %v1289 = vpop.f32.mrb[0].mxu0
        %v1290 = vadd.f32 0.0, %v1289
        %v1291 = vpop.f32.mrb[0].mxu0
        %v1292 = vadd.f32 0.0, %v1291
        %1293 = vmatprep.mubr.f32.mxu0 0.0
        %1294 = vmatmul.mubr.f32.gmra.mrb[0].mxu0 %v1217
        %v1295 = vpop.f32.mrb[0].mxu0
        %v1296 = vadd.f32 0.0, %v1295
        %v1297 = vpop.f32.mrb[0].mxu0
        %v1298 = vadd.f32 0.0, %v1297
        %1299 = vdwg.mxu0
        %v1300 = vadd.f32 %v1187, %v1290
        %v1301 = vadd.f32 %v1188, %v1292
        %v1302 = vadd.f32 %v1189, %v1296
        %v1303 = vadd.f32 %v1190, %v1298
        %v1304 = vld [vmem:[%s269] sm:$0xff]
        %v1305 = vld [vmem:[%s269 + $0x8] sm:$0xff]
        %v1306 = vadd.f32 %v1300, %v1301
        %1307 = vadd.xlane.f32.xlu0 %v1306
        %v1308 = vpop.xlane.xlu0 %1307
        %v1309 = vadd.f32 %v1302, %v1303
        %1310 = vadd.xlane.f32.xlu0 %v1309
        %v1311 = vpop.xlane.xlu0 %1310
        %v1312 = vmul.f32 %v1300, %v1300
        %v1313 = vmul.f32 %v1301, %v1301
        %v1314 = vmul.f32 %v1302, %v1302
        %v1315 = vmul.f32 %v1303, %v1303
        %v1316 = vadd.f32 %v1312, %v1313
        %1317 = vadd.xlane.f32.xlu0 %v1316
        %v1318 = vpop.xlane.xlu0 %1317
        %v1319 = vadd.f32 %v1314, %v1315
        %1320 = vadd.xlane.f32.xlu0 %v1319
        %v1321 = vpop.xlane.xlu0 %1320
        %v1322 = vmul.f32 %v1304, 256.0
        %v1323 = vmul.f32 %v1305, 256.0
        %v1324 = vadd.f32 %v1308, %v1322
        %v1325 = vadd.f32 %v1311, %v1323
        %v1326 = vmul.f32 %v1304, 2.0
        %v1327 = vmul.f32 %v1305, 2.0
        %v1328 = vmul.f32 %v1326, %v1308
        %v1329 = vmul.f32 %v1327, %v1311
        %v1330 = vadd.f32 %v1318, %v1328
        %v1331 = vadd.f32 %v1321, %v1329
        %v1332 = vmul.f32 %v1322, %v1304
        %v1333 = vmul.f32 %v1323, %v1305
        %v1334 = vadd.f32 %v1330, %v1332
        %v1335 = vadd.f32 %v1331, %v1333
        %v1336 = vld [vmem:[%s4] sm:$0xff]
        %1339 = vrot.lane.b32.xlu0 %v1334, 1
        %v1340 = vpop.permute.xlu0 %1339
        %1341 = vrot.lane.b32.xlu0 %v1335, 1
        %v1342 = vpop.permute.xlu0 %1341
        %v1345 = vsel %vm680, %v1324, %v1340
        %v1346 = vsel %vm680, %v1325, %v1342
        %v1348 = vsel %vm333, %v1336, 0
        %1350 = vmatprep.subr.mxu0 0.0
        %1351 = vmatpush1.msra.mxu0 %v1345
        %1352 = vmatprep.subr.mxu0 0.0
        %1353 = vmatpush1.msra.mxu0 %v1346
        %1354 = vmatprep.subr.mxu0 0.0
        %1355 = vmatpush1.msra.mxu0 0.0
        %1356 = vmatprep.subr.mxu0 0.0
        %1357 = vmatpush1.msra.mxu0 0.0
        %1358 = vmatprep.subr.mxu0 0.0
        %1359 = vmatpush1.msra.mxu0 0.0
        %1360 = vmatprep.subr.mxu0 0.0
        %1361 = vmatpush1.msra.mxu0 0.0
        %1362 = vmatprep.subr.mxu0 0.0
        %1363 = vmatpush1.msra.mxu0 0.0
        %1364 = vmatprep.subr.mxu0 0.0
        %1365 = vmatpush1.msra.mxu0 0.0
        %1366 = vmatprep.subr.mxu0 0.0
        %1367 = vmatpush1.msra.mxu0 0.0
        %1368 = vmatprep.subr.mxu0 0.0
        %1369 = vmatpush1.msra.mxu0 0.0
        %1370 = vmatprep.subr.mxu0 0.0
        %1371 = vmatpush1.msra.mxu0 0.0
        %1372 = vmatprep.subr.mxu0 0.0
        %1373 = vmatpush1.msra.mxu0 0.0
        %1374 = vmatprep.subr.mxu0 0.0
        %1375 = vmatpush1.msra.mxu0 0.0
        %1376 = vmatprep.subr.mxu0 0.0
        %1377 = vmatpush1.msra.mxu0 0.0
        %1378 = vmatprep.subr.mxu0 0.0
        %1379 = vmatpush1.msra.mxu0 0.0
        %1380 = vmatprep.subr.mxu0 0.0
        %1381 = vmatpush1.msra.mxu0 0.0
        %1382 = vmatprep.subr.mxu0 0.0
        %1383 = vmatpush1.msra.mxu0 0.0
        %1384 = vmatprep.subr.mxu0 0.0
        %1385 = vmatpush1.msra.mxu0 0.0
        %1386 = vmatprep.subr.mxu0 0.0
        %1387 = vmatpush1.msra.mxu0 0.0
        %1388 = vmatprep.subr.mxu0 0.0
        %1389 = vmatpush1.msra.mxu0 0.0
        %1390 = vmatprep.subr.mxu0 0.0
        %1391 = vmatpush1.msra.mxu0 0.0
        %1392 = vmatprep.subr.mxu0 0.0
        %1393 = vmatpush1.msra.mxu0 0.0
        %1394 = vmatprep.subr.mxu0 0.0
        %1395 = vmatpush1.msra.mxu0 0.0
        %1396 = vmatprep.subr.mxu0 0.0
        %1397 = vmatpush1.msra.mxu0 0.0
        %1398 = vmatprep.subr.mxu0 0.0
        %1399 = vmatpush1.msra.mxu0 0.0
        %1400 = vmatprep.subr.mxu0 0.0
        %1401 = vmatpush1.msra.mxu0 0.0
        %1402 = vmatprep.subr.mxu0 0.0
        %1403 = vmatpush1.msra.mxu0 0.0
        %1404 = vmatprep.subr.mxu0 0.0
        %1405 = vmatpush1.msra.mxu0 0.0
        %1406 = vmatprep.subr.mxu0 0.0
        %1407 = vmatpush1.msra.mxu0 0.0
        %1408 = vmatprep.subr.mxu0 0.0
        %1409 = vmatpush1.msra.mxu0 0.0
        %1410 = vmatprep.subr.mxu0 0.0
        %1411 = vmatpush1.msra.mxu0 0.0
        %1412 = vmatprep.subr.mxu0 0.0
        %1413 = vmatpush1.msra.mxu0 0.0
        %1414 = vmatprep.mubr.f32.mxu0 0.0
        %1415 = vmatmul.mubr.f32.gmra.mrb[0].mxu0 %v1348
        %v1416 = vpop.f32.mrb[0].mxu0
        %v1417 = vadd.f32 0.0, %v1416
        %v1418 = vpop.f32.mrb[0].mxu0
        %1419 = vdwg.mxu0
        %v1420 = vrcp.pop 512.0
        %v1421 = vmul.f32 %v1417, %v1420
        %v1422 = vmul.f32 %v1421, %v1421
        %1424 = vrot.lane.b32.xlu0 %v1422, 1
        %v1425 = vpop.permute.xlu0 %1424
        %v1427 = vsub.f32 %v1421, %v1425
        %v1428 = vadd.f32 %v1427, 1e-05
        %v1429 = vrsqrt.pop %v1428
        %v1430 = vld [vmem:[%s5] sm:$0xff]
        %v1431 = vld [vmem:[%s5 + $0x8] sm:$0xff]
        %v1432 = vsel %vm680, %v1421, %v1429
        %vm1433 = vcmask 64512
        %v1435 = vsel %vm1433, %v1430, 0
        %v1438 = vsel %vm1433, %v1431, 0
        %1440 = vmatprep.subr.mxu0 0.0
        %1441 = vmatpush1.msra.mxu0 %v1432
        %1442 = vmatprep.subr.mxu0 0.0
        %1443 = vmatpush1.msra.mxu0 0.0
        %1444 = vmatprep.subr.mxu0 0.0
        %1445 = vmatpush1.msra.mxu0 0.0
        %1446 = vmatprep.subr.mxu0 0.0
        %1447 = vmatpush1.msra.mxu0 0.0
        %1448 = vmatprep.subr.mxu0 0.0
        %1449 = vmatpush1.msra.mxu0 0.0
        %1450 = vmatprep.subr.mxu0 0.0
        %1451 = vmatpush1.msra.mxu0 0.0
        %1452 = vmatprep.subr.mxu0 0.0
        %1453 = vmatpush1.msra.mxu0 0.0
        %1454 = vmatprep.subr.mxu0 0.0
        %1455 = vmatpush1.msra.mxu0 0.0
        %1456 = vmatprep.subr.mxu0 0.0
        %1457 = vmatpush1.msra.mxu0 0.0
        %1458 = vmatprep.subr.mxu0 0.0
        %1459 = vmatpush1.msra.mxu0 0.0
        %1460 = vmatprep.subr.mxu0 0.0
        %1461 = vmatpush1.msra.mxu0 0.0
        %1462 = vmatprep.subr.mxu0 0.0
        %1463 = vmatpush1.msra.mxu0 0.0
        %1464 = vmatprep.subr.mxu0 0.0
        %1465 = vmatpush1.msra.mxu0 0.0
        %1466 = vmatprep.subr.mxu0 0.0
        %1467 = vmatpush1.msra.mxu0 0.0
        %1468 = vmatprep.subr.mxu0 0.0
        %1469 = vmatpush1.msra.mxu0 0.0
        %1470 = vmatprep.subr.mxu0 0.0
        %1471 = vmatpush1.msra.mxu0 0.0
        %1472 = vmatprep.subr.mxu0 0.0
        %1473 = vmatpush1.msra.mxu0 0.0
        %1474 = vmatprep.subr.mxu0 0.0
        %1475 = vmatpush1.msra.mxu0 0.0
        %1476 = vmatprep.subr.mxu0 0.0
        %1477 = vmatpush1.msra.mxu0 0.0
        %1478 = vmatprep.subr.mxu0 0.0
        %1479 = vmatpush1.msra.mxu0 0.0
        %1480 = vmatprep.subr.mxu0 0.0
        %1481 = vmatpush1.msra.mxu0 0.0
        %1482 = vmatprep.subr.mxu0 0.0
        %1483 = vmatpush1.msra.mxu0 0.0
        %1484 = vmatprep.subr.mxu0 0.0
        %1485 = vmatpush1.msra.mxu0 0.0
        %1486 = vmatprep.subr.mxu0 0.0
        %1487 = vmatpush1.msra.mxu0 0.0
        %1488 = vmatprep.subr.mxu0 0.0
        %1489 = vmatpush1.msra.mxu0 0.0
        %1490 = vmatprep.subr.mxu0 0.0
        %1491 = vmatpush1.msra.mxu0 0.0
        %1492 = vmatprep.subr.mxu0 0.0
        %1493 = vmatpush1.msra.mxu0 0.0
        %1494 = vmatprep.subr.mxu0 0.0
        %1495 = vmatpush1.msra.mxu0 0.0
        %1496 = vmatprep.subr.mxu0 0.0
        %1497 = vmatpush1.msra.mxu0 0.0
        %1498 = vmatprep.subr.mxu0 0.0
        %1499 = vmatpush1.msra.mxu0 0.0
        %1500 = vmatprep.subr.mxu0 0.0
        %1501 = vmatpush1.msra.mxu0 0.0
        %1502 = vmatprep.subr.mxu0 0.0
        %1503 = vmatpush1.msra.mxu0 0.0
        %1504 = vmatprep.mubr.f32.mxu0 0.0
        %1505 = vmatmul.mubr.f32.gmra.mrb[0].mxu0 %v1435
        %v1506 = vpop.f32.mrb[0].mxu0
        %v1507 = vadd.f32 0.0, %v1506
        %v1508 = vpop.f32.mrb[0].mxu0
        %1509 = vmatprep.mubr.f32.mxu0 0.0
        %1510 = vmatmul.mubr.f32.gmra.mrb[0].mxu0 %v1438
        %v1511 = vpop.f32.mrb[0].mxu0
        %v1512 = vadd.f32 0.0, %v1511
        %v1513 = vpop.f32.mrb[0].mxu0
        %1514 = vdwg.mxu0
        %v1515 = vmul.f32 %v1507, %v1304
        %v1516 = vmul.f32 %v1512, %v1305
        %v1517 = vsub.f32 %v1304, %v1507
        %v1518 = vsub.f32 %v1305, %v1512
        %1521 = vrot.lane.b32.xlu0 %v1515, 127
        %v1522 = vpop.permute.xlu0 %1521
        %1523 = vrot.lane.b32.xlu0 %v1516, 127
        %v1524 = vpop.permute.xlu0 %1523
        %v1527 = vmul.f32 %v1517, %v1522
        %v1528 = vmul.f32 %v1518, %v1524
        %1531 = vrot.lane.b32.xlu0 %v1527, 2
        %v1532 = vpop.permute.xlu0 %1531
        %1533 = vrot.lane.b32.xlu0 %v1528, 2
        %v1534 = vpop.permute.xlu0 %1533
        %v1537 = vadd.f32 %v1304, %v1532
        %v1538 = vadd.f32 %v1305, %v1534
        %v1539 = vadd.f32 %v1304, 1.0
        %v1540 = vadd.f32 %v1305, 1.0
        %1543 = vrot.lane.b32.xlu0 %v1539, 126
        %v1544 = vpop.permute.xlu0 %1543
        %1545 = vrot.lane.b32.xlu0 %v1540, 126
        %v1546 = vpop.permute.xlu0 %1545
        %v1549 = vmul.f32 %v1515, %v1544
        %v1550 = vmul.f32 %v1516, %v1546
        %1551 = vrot.lane.b32.xlu0 %v1539, 127
        %v1552 = vpop.permute.xlu0 %1551
        %1553 = vrot.lane.b32.xlu0 %v1540, 127
        %v1554 = vpop.permute.xlu0 %1553
        %v1557 = vmul.f32 %v1537, %v1552
        %v1558 = vmul.f32 %v1538, %v1554
        %1561 = vrot.lane.b32.xlu0 %v1304, 126
        %v1562 = vpop.permute.xlu0 %1561
        %1563 = vrot.lane.b32.xlu0 %v1305, 126
        %v1564 = vpop.permute.xlu0 %1563
        %v1567 = vadd.f32 %v1557, %v1562
        %v1568 = vadd.f32 %v1558, %v1564
        %1570 = vset.pattern.permute.xlu0 1
        %1571 = vperm.xlu0 %1570, %v1549
        %v1572 = vpop.permute.xlu0 %1571
        %1575 = vset.pattern.permute.xlu0 1
        %1576 = vperm.xlu0 %1575, %v1550
        %v1577 = vpop.permute.xlu0 %1576
        %v1579 = vmul.f32 %v1300, %v1572
        %v1580 = vmul.f32 %v1301, %v1572
        %v1581 = vmul.f32 %v1302, %v1577
        %v1582 = vmul.f32 %v1303, %v1577
        %1584 = vset.pattern.permute.xlu0 2
        %1585 = vperm.xlu0 %1584, %v1567
        %v1586 = vpop.permute.xlu0 %1585
        %1589 = vset.pattern.permute.xlu0 2
        %1590 = vperm.xlu0 %1589, %v1568
        %v1591 = vpop.permute.xlu0 %1590
        %v1593 = vadd.f32 %v1579, %v1586
        %v1594 = vadd.f32 %v1580, %v1586
        %v1595 = vadd.f32 %v1581, %v1591
        %v1596 = vadd.f32 %v1582, %v1591
        %v1597 = vxor.u32 %v1593, 2147483648
        %v1598 = vxor.u32 %v1594, 2147483648
        %v1599 = vxor.u32 %v1595, 2147483648
        %v1600 = vxor.u32 %v1596, 2147483648
        %v1601 = vmul.f32 %v1597, 1.442695
        %v1602 = vpow.pop %v1601
        %v1603 = vmul.f32 %v1598, 1.442695
        %v1604 = vpow.pop %v1603
        %v1605 = vmul.f32 %v1599, 1.442695
        %v1606 = vpow.pop %v1605
        %v1607 = vmul.f32 %v1600, 1.442695
        %v1608 = vpow.pop %v1607
        %v1609 = vadd.f32 %v1602, 1.0
        %v1610 = vadd.f32 %v1604, 1.0
        %v1611 = vadd.f32 %v1606, 1.0
        %v1612 = vadd.f32 %v1608, 1.0
        %v1613 = vrcp.pop %v1609
        %v1614 = vmul.f32 1.0, %v1613
        %v1615 = vrcp.pop %v1610
        %v1616 = vmul.f32 1.0, %v1615
        %v1617 = vrcp.pop %v1611
        %v1618 = vmul.f32 1.0, %v1617
        %v1619 = vrcp.pop %v1612
        %v1620 = vmul.f32 1.0, %v1619
        %v1621 = vmul.f32 %v1593, %v1614
        %v1622 = vmul.f32 %v1594, %v1616
        %v1623 = vmul.f32 %v1595, %v1618
        %v1624 = vmul.f32 %v1596, %v1620
        %1625 = vst [vmem:[%s259] sm:$0xff] %v1621
        %1626 = vst [vmem:[%s259 + $0x8] sm:$0xff] %v1622
        %1627 = vst [vmem:[%s259 + $0x10] sm:$0xff] %v1623
        %1628 = vst [vmem:[%s259 + $0x18] sm:$0xff] %v1624
        %s1629 = sand.u32 %s164, 1
        %s1630 = scalar_lea.sflag [#allocation3], %s1629
        %s1631 = sand.u32 %s164, 1
        %s1632 = smul.addr %s1631, 32
        %s1633 = scalar_lea.vmem [#allocation2], %s1632
        // Predicated region
        $region45: #{tpu_custom_call.1} parent=43 // pred_check
          %p1634 = pneg %p174
        $region46: #{tpu_custom_call.1} parent=43 // pred_check_branch
          %1636 = sbr.rel (%p1634) target = $region48
        $region47: #{tpu_custom_call.1} parent=43 // pred_region
          %s1638 = ssub.s32 512, 512
          %1639 = vsyncadd %s1630, %s1638
          %s1640 = smul.addr %s20, 4
          %s1641 = smul.addr %s1640, 128
          %s1642 = scalar_lea.hbm %s6, %s1641
          %s1643 = sshll.u32 %s1633, 4
          %s1644 = int_to_ptr.vmem [resolvable:$true] %s1643
          %1649 = dma.vmem_to_hbm [thread:$0]  %s1644, 512, %s1642, %s1630, 256, 256, 16
        $region48: #{tpu_custom_call.1} parent=43 // pred_fallthru
          _
      $region44: #{tpu_custom_call.1} parent=5 // pred_fallthru
        _
      %p1650 = scmp.le.s32.totalorder 2, %s15
      // Predicated region
      $region49: #{tpu_custom_call.1} parent=5 // pred_check
        %p1651 = pneg %p1650
      $region50: #{tpu_custom_call.1} parent=5 // pred_check_branch
        %1653 = sbr.rel (%p1651) target = $region52
      $region51: #{tpu_custom_call.1} parent=5 // pred_region
        %s1654 = ssub.s32 %s15, 2
        // Predicated region
        $region53: #{tpu_custom_call.1} parent=51 // pred_check
          %p1655 = pneg %p180
        $region54: #{tpu_custom_call.1} parent=51 // pred_check_branch
          %1657 = sbr.rel (%p1655) target = $region56
        $region55: #{tpu_custom_call.1} parent=51 // pred_region
          %s1658 = sand.u32 %s165, 1
          %s1659 = scalar_lea.sflag [#allocation3], %s1658
          %s1660 = sand.u32 %s165, 1
          %s1661 = smul.addr %s1660, 32
          %s1662 = scalar_lea.vmem [#allocation2], %s1661
          %1663 = dma.done %s1659, 512
        $region56: #{tpu_custom_call.1} parent=51 // pred_fallthru
          _
      $region52: #{tpu_custom_call.1} parent=5 // pred_fallthru
        _
    $region6: #{tpu_custom_call.1} parent=1 // loop_footer
      %s19 = sadd.s32 1, %s15
    $region7: #{tpu_custom_call.1} parent=1 // loop_footer_branch
      %14 = sbr.rel target = $region3
    $region8: #{tpu_custom_call.1} parent=1 // loop_exit
      _
    %1664 = vsyncpa [#allocation3], 1
    %s1665 = scalar_lea.sflag [#allocation3], 1
    %1666 = vsyncpa %s1665, 1

</llo_original>
